<compile_context>
chip_gen: v5e
topology: v5e:2x2
jax: 0.10.0
libtpu: 0.0.40
codegen_flags: <defaults>
</compile_context>

<pallas_src>
import functools

import jax
import jax.numpy as jnp
from jax.experimental import pallas as pl
from jax.experimental.pallas import tpu as pltpu

BN_EPS = 1e-5
LANE = 128

# v7x physical VMEM is 64 MiB (32 MiB scoped default) -> 48 MiB keeps
# double-buffering headroom there; trivially legal on v5e/v6e (128 MiB).
VMEM_LIMIT = 48 * 1024 * 1024

# Fused single-step path: used when the entire working set is comfortably
# resident AND the graph is small enough that losing megacore row-sharding
# (v7x: 2 TCs) is irrelevant (these sizes are launch/overhead bound).
FUSED_MAX_NPAD = 1024
FUSED_VMEM_BUDGET = 24 * 1024 * 1024


def _round_up(x, m):
    return (x + m - 1) // m * m


def _pick_row_tile(n_pad):
    # Streaming path only: biggest row tile whose double-buffered (tm, n_pad)
    # A-slab stays within ~1/4 of the VMEM budget.  No ">=2 grid steps" rule.
    for t in (1024, 512, 256, 128):
        if n_pad % t == 0 and 2 * t * n_pad * 2 <= VMEM_LIMIT // 4:
            return t
    return 128


def _fused_vmem_bytes(n_pad, f_pad, h_pad, h2_pad, c_pad, num_layers):
    """Conservative resident-working-set estimate for the fused kernel."""
    b = n_pad * n_pad * 2                            # A_hat (bf16)
    b += n_pad * f_pad * 2                           # x (bf16)
    b += 3 * n_pad * max(f_pad, h_pad) * 4           # h / xw temporaries (f32)
    b += f_pad * h_pad * 2 + (num_layers - 1) * h_pad * h_pad * 2  # conv W'
    b += num_layers * h_pad * 4                      # folded biases (f32)
    b += h_pad * h2_pad * 2 + h2_pad * 4             # classifier L1
    b += h2_pad * c_pad * 2 + c_pad * 4              # classifier L2
    b += n_pad * c_pad * 4                           # logits out (f32)
    return b


# ----------------------------------------------------------------------------
# Fused kernel: all GCN layers + classifier, everything resident in VMEM.
# ----------------------------------------------------------------------------
def fused_gnn_kernel(num_layers, *refs):
    a_ref, x_ref = refs[0], refs[1]
    layer_refs = refs[2:2 + 2 * num_layers]
    wc1_ref, bc1_ref, wc2_ref, bc2_ref = refs[2 + 2 * num_layers:-1]
    out_ref = refs[-1]

    a = a_ref[...]                                   # A_hat, bf16, resident
    h = x_ref[...]
    for l in range(num_layers):
        w_ref = layer_refs[2 * l]
        b_ref = layer_refs[2 * l + 1]
        # xw computed once per layer; BN folded into W'/b'.
        xw = jnp.dot(h, w_ref[...],
                     preferred_element_type=jnp.float32).astype(jnp.bfloat16)
        agg = jnp.dot(a, xw, preferred_element_type=jnp.float32) + b_ref[...]
        h = jnp.maximum(agg, 0.0).astype(jnp.bfloat16)
        # F.dropout is identity in eval mode -> omitted.

    # Classifier MLP epilogue (Linear -> ReLU -> [dropout=id] -> Linear).
    hh = jnp.dot(h, wc1_ref[...], preferred_element_type=jnp.float32) + bc1_ref[...]
    hh = jnp.maximum(hh, 0.0).astype(jnp.bfloat16)
    out_ref[...] = (
        jnp.dot(hh, wc2_ref[...], preferred_element_type=jnp.float32) + bc2_ref[...]
    )


def fused_forward(a_hat, x, layers, cls):
    n = a_hat.shape[0]
    c_pad = cls[2].shape[1]
    flat = []
    for w, b in layers:
        flat += [w, b]
    kern = functools.partial(fused_gnn_kernel, len(layers))
    # No grid: every operand is a single full-extent VMEM block (all dims are
    # already 128-padded), one kernel invocation, one HBM write of the logits.
    return pl.pallas_call(
        kern,
        out_shape=jax.ShapeDtypeStruct((n, c_pad), jnp.float32),
        compiler_params=pltpu.CompilerParams(vmem_limit_bytes=VMEM_LIMIT),
    )(a_hat, x, *flat, *cls)


# ----------------------------------------------------------------------------
# Streaming fallback (large graphs): per-layer kernels, parallel row grid only.
# ----------------------------------------------------------------------------
def linear_kernel(x_ref, w_ref, out_ref):
    out_ref[...] = jnp.dot(
        x_ref[...], w_ref[...], preferred_element_type=jnp.float32
    ).astype(out_ref.dtype)


def aggregate_relu_kernel(a_ref, xw_ref, b_ref, out_ref):
    # out = relu(A_slab @ XW + b'); XW is fully resident -> no K axis, no acc.
    agg = jnp.dot(a_ref[...], xw_ref[...],
                  preferred_element_type=jnp.float32) + b_ref[...]
    out_ref[...] = jnp.maximum(agg, 0.0).astype(out_ref.dtype)


def classifier_kernel(x_ref, w1_ref, b1_ref, w2_ref, b2_ref, out_ref):
    h = jnp.dot(x_ref[...], w1_ref[...], preferred_element_type=jnp.float32)
    h = jnp.maximum(h + b1_ref[...], 0.0).astype(jnp.bfloat16)
    out_ref[...] = (
        jnp.dot(h, w2_ref[...], preferred_element_type=jnp.float32) + b2_ref[...]
    )


def linear(x, w, *, tm):
    n, f = x.shape
    h = w.shape[1]
    return pl.pallas_call(
        linear_kernel,
        out_shape=jax.ShapeDtypeStruct((n, h), jnp.bfloat16),
        grid_spec=pltpu.PrefetchScalarGridSpec(
            num_scalar_prefetch=0,
            grid=(n // tm,),
            in_specs=[
                pl.BlockSpec((tm, f), lambda i: (i, 0)),
                pl.BlockSpec((f, h), lambda i: (0, 0)),
            ],
            out_specs=pl.BlockSpec((tm, h), lambda i: (i, 0)),
        ),
        compiler_params=pltpu.CompilerParams(
            dimension_semantics=("parallel",), vmem_limit_bytes=VMEM_LIMIT),
    )(x, w)


def aggregate_relu(a_hat, xw, bias, *, tm):
    n = a_hat.shape[0]
    h = xw.shape[1]
    return pl.pallas_call(
        aggregate_relu_kernel,
        out_shape=jax.ShapeDtypeStruct((n, h), jnp.bfloat16),
        grid_spec=pltpu.PrefetchScalarGridSpec(
            num_scalar_prefetch=0,
            grid=(n // tm,),
            in_specs=[
                pl.BlockSpec((tm, n), lambda i: (i, 0)),   # A_hat row slab
                pl.BlockSpec((n, h), lambda i: (0, 0)),    # XW fully resident
                pl.BlockSpec((1, h), lambda i: (0, 0)),    # folded bias
            ],
            out_specs=pl.BlockSpec((tm, h), lambda i: (i, 0)),
        ),
        compiler_params=pltpu.CompilerParams(
            dimension_semantics=("parallel",), vmem_limit_bytes=VMEM_LIMIT),
    )(a_hat, xw, bias)


def classifier(h, w1, b1, w2, b2, *, tm):
    n, hd = h.shape
    c = w2.shape[1]
    return pl.pallas_call(
        classifier_kernel,
        out_shape=jax.ShapeDtypeStruct((n, c), jnp.float32),
        grid_spec=pltpu.PrefetchScalarGridSpec(
            num_scalar_prefetch=0,
            grid=(n // tm,),
            in_specs=[
                pl.BlockSpec((tm, hd), lambda i: (i, 0)),
                pl.BlockSpec(w1.shape, lambda i: (0, 0)),
                pl.BlockSpec(b1.shape, lambda i: (0, 0)),
                pl.BlockSpec(w2.shape, lambda i: (0, 0)),
                pl.BlockSpec(b2.shape, lambda i: (0, 0)),
            ],
            out_specs=pl.BlockSpec((tm, c), lambda i: (i, 0)),
        ),
        compiler_params=pltpu.CompilerParams(
            dimension_semantics=("parallel",), vmem_limit_bytes=VMEM_LIMIT),
    )(h, w1, b1, w2, b2)


# ----------------------------------------------------------------------------
# Plain-JAX glue: normalized adjacency (GCN norm + self loops), padded + bf16.
# Matches PyG gcn_norm (flow='source_to_target'): messages src->dst, degrees
# from the row-sums of (A+I) under that convention, symmetric D^-1/2 scaling;
# duplicate edges accumulate weight (scatter-add semantics), like PyG.
# ----------------------------------------------------------------------------
def build_gcn_adj(edge_index, num_nodes, n_pad, edge_weight=None):
    src, dst = edge_index[0], edge_index[1]
    w = (jnp.ones(src.shape[0], jnp.float32)
         if edge_weight is None else edge_weight.astype(jnp.float32))
    adj = jnp.zeros((num_nodes, num_nodes), jnp.float32)
    adj = adj.at[dst, src].add(w)
    adj = adj + jnp.eye(num_nodes, dtype=jnp.float32)   # self loops
    deg = adj.sum(axis=1)
    dinv = jnp.where(deg > 0, jax.lax.rsqrt(deg), 0.0)
    a_hat = dinv[:, None] * adj * dinv[None, :]
    a_pad = jnp.zeros((n_pad, n_pad), jnp.float32)
    a_pad = a_pad.at[:num_nodes, :num_nodes].set(a_hat)
    return a_pad.astype(jnp.bfloat16)


# ----------------------------------------------------------------------------
# Parameters: PyTorch-style init, then BN-fold + lane-pad + bf16 for inference.
# ----------------------------------------------------------------------------
def init_params(key, num_features, num_classes, hidden_dim, num_layers):
    params = {"convs": [], "bns": []}
    dims = [num_features] + [hidden_dim] * num_layers
    for i in range(num_layers):
        key, kw = jax.random.split(key)
        fan_in, fan_out = dims[i], dims[i + 1]
        limit = jnp.sqrt(6.0 / (fan_in + fan_out))       # glorot (PyG default)
        w = jax.random.uniform(kw, (fan_in, fan_out), jnp.float32, -limit, limit)
        b = jnp.zeros((fan_out,), jnp.float32)
        params["convs"].append((w, b))
        # BatchNorm defaults: gamma=1, beta=0, running_mean=0, running_var=1
        params["bns"].append((jnp.ones((fan_out,), jnp.float32),
                              jnp.zeros((fan_out,), jnp.float32),
                              jnp.zeros((fan_out,), jnp.float32),
                              jnp.ones((fan_out,), jnp.float32)))
    h2 = hidden_dim // 2
    key, k1, k2, k3, k4 = jax.random.split(key, 5)
    lim1 = 1.0 / jnp.sqrt(hidden_dim)
    lim2 = 1.0 / jnp.sqrt(h2)
    params["cls"] = (
        jax.random.uniform(k1, (hidden_dim, h2), jnp.float32, -lim1, lim1),
        jax.random.uniform(k2, (h2,), jnp.float32, -lim1, lim1),
        jax.random.uniform(k3, (h2, num_classes), jnp.float32, -lim2, lim2),
        jax.random.uniform(k4, (num_classes,), jnp.float32, -lim2, lim2),
    )
    return params


def prepare_inference_params(params, num_features, hidden_dim, num_classes):
    """Fold eval-mode BN into conv weights, pad all lane dims to 128, cast bf16."""
    f_pad = _round_up(num_features, LANE)
    h_pad = _round_up(hidden_dim, LANE)
    c_pad = _round_up(num_classes, LANE)
    h2 = hidden_dim // 2
    h2_pad = _round_up(h2, LANE)

    layers = []
    in_pad = f_pad
    for (w, b), (gamma, beta, mean, var) in zip(params["convs"], params["bns"]):
        scale = gamma * jax.lax.rsqrt(var + BN_EPS)
        w_f = w * scale[None, :]                       # W' = W * scale
        b_f = (b - mean) * scale + beta                # b' = (b-mean)*scale+beta
        w_p = (jnp.zeros((in_pad, h_pad), jnp.float32)
               .at[: w.shape[0], : w.shape[1]].set(w_f).astype(jnp.bfloat16))
        b_p = jnp.zeros((1, h_pad), jnp.float32).at[0, : b.shape[0]].set(b_f)
        layers.append((w_p, b_p))
        in_pad = h_pad

    w1, b1, w2, b2 = params["cls"]
    w1_p = (jnp.zeros((h_pad, h2_pad), jnp.float32)
            .at[:hidden_dim, :h2].set(w1).astype(jnp.bfloat16))
    b1_p = jnp.zeros((1, h2_pad), jnp.float32).at[0, :h2].set(b1)
    w2_p = (jnp.zeros((h2_pad, c_pad), jnp.float32)
            .at[:h2, :num_classes].set(w2).astype(jnp.bfloat16))
    b2_p = jnp.zeros((1, c_pad), jnp.float32).at[0, :num_classes].set(b2)
    return {"layers": layers, "cls": (w1_p, b1_p, w2_p, b2_p)}


# ----------------------------------------------------------------------------
# Forward
# ----------------------------------------------------------------------------
@jax.jit
def neural_gnn_forward_padded(inf_params, a_hat_pad, x_pad):
    layers = inf_params["layers"]
    cls = inf_params["cls"]
    n_pad = a_hat_pad.shape[0]
    f_pad = x_pad.shape[1]
    h_pad = layers[0][0].shape[1]
    h2_pad = cls[0].shape[1]
    c_pad = cls[2].shape[1]

    ws_bytes = _fused_vmem_bytes(n_pad, f_pad, h_pad, h2_pad, c_pad, len(layers))
    if n_pad <= FUSED_MAX_NPAD and ws_bytes <= FUSED_VMEM_BUDGET:
        # Single fused pallas_call: A_hat / weights / h resident in VMEM.
        return fused_forward(a_hat_pad, x_pad, layers, cls)

    # Streaming fallback for larger graphs: purely "parallel" row-tile grids
    # (megacore-friendly on v7x), XW held fully resident per layer.
    # TODO(synk): fold the classifier into the last layer's epilogue and add a
    #             block-CSR K axis + quantized A_hat for HBM-bound graph sizes.
    tm = _pick_row_tile(n_pad)
    h = x_pad
    for w, b in layers:
        xw = linear(h, w, tm=tm)
        h = aggregate_relu(a_hat_pad, xw, b, tm=tm)
    w1, b1, w2, b2 = cls
    return classifier(h, w1, b1, w2, b2, tm=tm)


# pure-JAX reference with identical bf16/f32 mixed precision
def reference_forward(inf_params, a_hat_pad, x_pad):
    h = x_pad
    for w, b in inf_params["layers"]:
        xw = jnp.dot(h, w, preferred_element_type=jnp.float32).astype(jnp.bfloat16)
        agg = jnp.dot(a_hat_pad, xw, preferred_element_type=jnp.float32) + b
        h = jnp.maximum(agg, 0.0).astype(jnp.bfloat16)
    w1, b1, w2, b2 = inf_params["cls"]
    hh = jnp.maximum(
        jnp.dot(h, w1, preferred_element_type=jnp.float32) + b1, 0.0
    ).astype(jnp.bfloat16)
    return jnp.dot(hh, w2, preferred_element_type=jnp.float32) + b2


if __name__ == "__main__":
    num_nodes, num_features, hidden_dim = 256, 16, 64
    num_classes, num_layers, num_edges = 4, 3, 1024

    key = jax.random.PRNGKey(0)
    kx, ke, kp = jax.random.split(key, 3)
    x = jax.random.normal(kx, (num_nodes, num_features), jnp.float32)
    edge_index = jax.random.randint(ke, (2, num_edges), 0, num_nodes, jnp.int32)

    params = init_params(kp, num_features, num_classes, hidden_dim, num_layers)
    inf_params = prepare_inference_params(params, num_features, hidden_dim,
                                          num_classes)

    n_pad = _round_up(num_nodes, LANE)
    f_pad = _round_up(num_features, LANE)
    a_hat = build_gcn_adj(edge_index, num_nodes, n_pad)
    x_pad = (jnp.zeros((n_pad, f_pad), jnp.float32)
             .at[:num_nodes, :num_features].set(x).astype(jnp.bfloat16))

    logits_pad = neural_gnn_forward_padded(inf_params, a_hat, x_pad)
    logits_pad = jax.block_until_ready(logits_pad)
    logits = logits_pad[:num_nodes, :num_classes]

    ref = reference_forward(inf_params, a_hat, x_pad)[:num_nodes, :num_classes]

    assert logits.shape == (num_nodes, num_classes)
    assert jnp.allclose(logits, ref, atol=2e-2, rtol=2e-2), "mismatch vs reference"
    print("KERNEL_OK")
</pallas_src>

<mosaic_0001>
module attributes {stable_mosaic.version = 11 : i64} {
  func.func @fused_gnn_kernel(%arg0: memref<256x256xbf16, #tpu.memory_space<vmem>>, %arg1: memref<256x128xbf16, #tpu.memory_space<vmem>>, %arg2: memref<128x128xbf16, #tpu.memory_space<vmem>>, %arg3: memref<1x128xf32, #tpu.memory_space<vmem>>, %arg4: memref<128x128xbf16, #tpu.memory_space<vmem>>, %arg5: memref<1x128xf32, #tpu.memory_space<vmem>>, %arg6: memref<128x128xbf16, #tpu.memory_space<vmem>>, %arg7: memref<1x128xf32, #tpu.memory_space<vmem>>, %arg8: memref<128x128xbf16, #tpu.memory_space<vmem>>, %arg9: memref<1x128xf32, #tpu.memory_space<vmem>>, %arg10: memref<128x128xbf16, #tpu.memory_space<vmem>>, %arg11: memref<1x128xf32, #tpu.memory_space<vmem>>, %arg12: memref<256x128xf32, #tpu.memory_space<vmem>>) attributes {dimension_semantics = [], scalar_prefetch = 0 : i64, scratch_operands = 0 : i64, tpu.core_type = #tpu.core_type<tc>} {
    %c0 = arith.constant 0 : index
    %c0_0 = arith.constant 0 : index
    %0 = vector.load %arg0[%c0, %c0_0] : memref<256x256xbf16, #tpu.memory_space<vmem>>, vector<256x256xbf16>
    %c0_1 = arith.constant 0 : index
    %c0_2 = arith.constant 0 : index
    %1 = vector.load %arg1[%c0_1, %c0_2] : memref<256x128xbf16, #tpu.memory_space<vmem>>, vector<256x128xbf16>
    %c0_3 = arith.constant 0 : index
    %c0_4 = arith.constant 0 : index
    %2 = vector.load %arg2[%c0_3, %c0_4] : memref<128x128xbf16, #tpu.memory_space<vmem>>, vector<128x128xbf16>
    %cst = arith.constant dense<0.000000e+00> : vector<256x128xf32>
    %3 = tpu.matmul %1, %2, %cst {dimension_numbers = #tpu.dot_dimension_numbers<[1], [0], [0], [1], [0, 0, 1, 1], [], []>} : vector<256x128xbf16>, vector<128x128xbf16>, vector<256x128xf32> -> vector<256x128xf32>
    %4 = arith.truncf %3 : vector<256x128xf32> to vector<256x128xbf16>
    %cst_5 = arith.constant dense<0.000000e+00> : vector<256x128xf32>
    %5 = tpu.matmul %0, %4, %cst_5 {dimension_numbers = #tpu.dot_dimension_numbers<[1], [0], [0], [1], [0, 0, 1, 1], [], []>} : vector<256x256xbf16>, vector<256x128xbf16>, vector<256x128xf32> -> vector<256x128xf32>
    %c0_6 = arith.constant 0 : index
    %c0_7 = arith.constant 0 : index
    %6 = vector.load %arg3[%c0_6, %c0_7] : memref<1x128xf32, #tpu.memory_space<vmem>>, vector<1x128xf32>
    %7 = vector.broadcast %6 : vector<1x128xf32> to vector<256x128xf32>
    %8 = arith.addf %5, %7 : vector<256x128xf32>
    %cst_8 = arith.constant 0.000000e+00 : f32
    %9 = vector.broadcast %cst_8 : f32 to vector<256x128xf32>
    %10 = arith.maximumf %8, %9 : vector<256x128xf32>
    %11 = arith.truncf %10 : vector<256x128xf32> to vector<256x128xbf16>
    %c0_9 = arith.constant 0 : index
    %c0_10 = arith.constant 0 : index
    %12 = vector.load %arg4[%c0_9, %c0_10] : memref<128x128xbf16, #tpu.memory_space<vmem>>, vector<128x128xbf16>
    %cst_11 = arith.constant dense<0.000000e+00> : vector<256x128xf32>
    %13 = tpu.matmul %11, %12, %cst_11 {dimension_numbers = #tpu.dot_dimension_numbers<[1], [0], [0], [1], [0, 0, 1, 1], [], []>} : vector<256x128xbf16>, vector<128x128xbf16>, vector<256x128xf32> -> vector<256x128xf32>
    %14 = arith.truncf %13 : vector<256x128xf32> to vector<256x128xbf16>
    %cst_12 = arith.constant dense<0.000000e+00> : vector<256x128xf32>
    %15 = tpu.matmul %0, %14, %cst_12 {dimension_numbers = #tpu.dot_dimension_numbers<[1], [0], [0], [1], [0, 0, 1, 1], [], []>} : vector<256x256xbf16>, vector<256x128xbf16>, vector<256x128xf32> -> vector<256x128xf32>
    %c0_13 = arith.constant 0 : index
    %c0_14 = arith.constant 0 : index
    %16 = vector.load %arg5[%c0_13, %c0_14] : memref<1x128xf32, #tpu.memory_space<vmem>>, vector<1x128xf32>
    %17 = vector.broadcast %16 : vector<1x128xf32> to vector<256x128xf32>
    %18 = arith.addf %15, %17 : vector<256x128xf32>
    %cst_15 = arith.constant 0.000000e+00 : f32
    %19 = vector.broadcast %cst_15 : f32 to vector<256x128xf32>
    %20 = arith.maximumf %18, %19 : vector<256x128xf32>
    %21 = arith.truncf %20 : vector<256x128xf32> to vector<256x128xbf16>
    %c0_16 = arith.constant 0 : index
    %c0_17 = arith.constant 0 : index
    %22 = vector.load %arg6[%c0_16, %c0_17] : memref<128x128xbf16, #tpu.memory_space<vmem>>, vector<128x128xbf16>
    %cst_18 = arith.constant dense<0.000000e+00> : vector<256x128xf32>
    %23 = tpu.matmul %21, %22, %cst_18 {dimension_numbers = #tpu.dot_dimension_numbers<[1], [0], [0], [1], [0, 0, 1, 1], [], []>} : vector<256x128xbf16>, vector<128x128xbf16>, vector<256x128xf32> -> vector<256x128xf32>
    %24 = arith.truncf %23 : vector<256x128xf32> to vector<256x128xbf16>
    %cst_19 = arith.constant dense<0.000000e+00> : vector<256x128xf32>
    %25 = tpu.matmul %0, %24, %cst_19 {dimension_numbers = #tpu.dot_dimension_numbers<[1], [0], [0], [1], [0, 0, 1, 1], [], []>} : vector<256x256xbf16>, vector<256x128xbf16>, vector<256x128xf32> -> vector<256x128xf32>
    %c0_20 = arith.constant 0 : index
    %c0_21 = arith.constant 0 : index
    %26 = vector.load %arg7[%c0_20, %c0_21] : memref<1x128xf32, #tpu.memory_space<vmem>>, vector<1x128xf32>
    %27 = vector.broadcast %26 : vector<1x128xf32> to vector<256x128xf32>
    %28 = arith.addf %25, %27 : vector<256x128xf32>
    %cst_22 = arith.constant 0.000000e+00 : f32
    %29 = vector.broadcast %cst_22 : f32 to vector<256x128xf32>
    %30 = arith.maximumf %28, %29 : vector<256x128xf32>
    %31 = arith.truncf %30 : vector<256x128xf32> to vector<256x128xbf16>
    %c0_23 = arith.constant 0 : index
    %c0_24 = arith.constant 0 : index
    %32 = vector.load %arg8[%c0_23, %c0_24] : memref<128x128xbf16, #tpu.memory_space<vmem>>, vector<128x128xbf16>
    %cst_25 = arith.constant dense<0.000000e+00> : vector<256x128xf32>
    %33 = tpu.matmul %31, %32, %cst_25 {dimension_numbers = #tpu.dot_dimension_numbers<[1], [0], [0], [1], [0, 0, 1, 1], [], []>} : vector<256x128xbf16>, vector<128x128xbf16>, vector<256x128xf32> -> vector<256x128xf32>
    %c0_26 = arith.constant 0 : index
    %c0_27 = arith.constant 0 : index
    %34 = vector.load %arg9[%c0_26, %c0_27] : memref<1x128xf32, #tpu.memory_space<vmem>>, vector<1x128xf32>
    %35 = vector.broadcast %34 : vector<1x128xf32> to vector<256x128xf32>
    %36 = arith.addf %33, %35 : vector<256x128xf32>
    %cst_28 = arith.constant 0.000000e+00 : f32
    %37 = vector.broadcast %cst_28 : f32 to vector<256x128xf32>
    %38 = arith.maximumf %36, %37 : vector<256x128xf32>
    %39 = arith.truncf %38 : vector<256x128xf32> to vector<256x128xbf16>
    %c0_29 = arith.constant 0 : index
    %c0_30 = arith.constant 0 : index
    %40 = vector.load %arg10[%c0_29, %c0_30] : memref<128x128xbf16, #tpu.memory_space<vmem>>, vector<128x128xbf16>
    %cst_31 = arith.constant dense<0.000000e+00> : vector<256x128xf32>
    %41 = tpu.matmul %39, %40, %cst_31 {dimension_numbers = #tpu.dot_dimension_numbers<[1], [0], [0], [1], [0, 0, 1, 1], [], []>} : vector<256x128xbf16>, vector<128x128xbf16>, vector<256x128xf32> -> vector<256x128xf32>
    %c0_32 = arith.constant 0 : index
    %c0_33 = arith.constant 0 : index
    %42 = vector.load %arg11[%c0_32, %c0_33] : memref<1x128xf32, #tpu.memory_space<vmem>>, vector<1x128xf32>
    %43 = vector.broadcast %42 : vector<1x128xf32> to vector<256x128xf32>
    %44 = arith.addf %41, %43 : vector<256x128xf32>
    %c0_34 = arith.constant 0 : index
    %c0_35 = arith.constant 0 : index
    %45 = vector.load %arg12[%c0_34, %c0_35] : memref<256x128xf32, #tpu.memory_space<vmem>>, vector<256x128xf32>
    tpu.vector_store %arg12[%c0_34, %c0_35], %44 {strides = array<i32>} : memref<256x128xf32, #tpu.memory_space<vmem>>, vector<256x128xf32>,
    return
  }
}

</mosaic_0001>

<llo_original>
// kernel: neural_gnn_forward_padded.1
$region0: #{neural_gnn_forward_padded.1}
  #allocation0 [shape = 'u32[]', space=smem, size = 0x4, offset = 0x4, fixed_abs, tag = 'smem constant byte address 0x4 - core index']
  #allocation1 [shape = 'u32[72,128]{1,0:T(1,128)}', space=vmem, size = 0x9000, scoped, tag = 'internal scratch']
  %s0 = inlined_call_operand.hbm [shape: bf16[256,256], index: 0, kind: input, shape index: {}]
  %s1 = inlined_call_operand.hbm [shape: bf16[256,128], index: 1, kind: input, shape index: {}]
  %s2 = inlined_call_operand.hbm [shape: bf16[128,128], index: 2, kind: input, shape index: {}]
  %s3 = inlined_call_operand.vmem [shape: f32[1,128], index: 3, kind: input, shape index: {}]
  %s4 = inlined_call_operand.hbm [shape: bf16[128,128], index: 4, kind: input, shape index: {}]
  %s5 = inlined_call_operand.vmem [shape: f32[1,128], index: 5, kind: input, shape index: {}]
  %s6 = inlined_call_operand.hbm [shape: bf16[128,128], index: 6, kind: input, shape index: {}]
  %s7 = inlined_call_operand.vmem [shape: f32[1,128], index: 7, kind: input, shape index: {}]
  %s8 = inlined_call_operand.hbm [shape: bf16[128,128], index: 8, kind: input, shape index: {}]
  %s9 = inlined_call_operand.hbm [shape: f32[1,128], index: 9, kind: input, shape index: {}]
  %s10 = inlined_call_operand.hbm [shape: bf16[128,128], index: 10, kind: input, shape index: {}]
  %s11 = inlined_call_operand.hbm [shape: f32[1,128], index: 11, kind: input, shape index: {}]
  %s12 = inlined_call_operand.hbm [shape: f32[256,128], index: 12, kind: output, shape index: {}]
  %s13 = sld [smem:[#allocation0]]
  $region94: #{neural_gnn_forward_padded.1} parent=0
    _
  %s15 = ssub.s32 1, %s13
  %s16 = scalar_select 0, %s15, %s13
  $region1: #{neural_gnn_forward_padded.1} parent=0
    #allocation2 [shape = 'u8[131072]{0}', space=vmem, size = 0x20000, scoped, tag = 'input window, operand 0, single buffered']
    #allocation3 [shape = 's32[1]{0}', space=sflag, size = 0x4, scoped, tag = 'scoped memory for neural_gnn_forward_padded.1']
    #allocation4 [shape = 's32[1]{0}', space=sflag, size = 0x4, scoped, tag = 'scoped memory for neural_gnn_forward_padded.1']
    #allocation5 [shape = 'u8[65536]{0}', space=vmem, size = 0x10000, scoped, tag = 'input window, operand 1, single buffered']
    #allocation6 [shape = 's32[1]{0}', space=sflag, size = 0x4, scoped, tag = 'scoped memory for neural_gnn_forward_padded.1']
    #allocation7 [shape = 'u8[32768]{0}', space=vmem, size = 0x8000, scoped, tag = 'input window, operand 2, single buffered']
    #allocation8 [shape = 'u8[32768]{0}', space=vmem, size = 0x8000, scoped, tag = 'input window, operand 4, single buffered']
    #allocation9 [shape = 's32[1]{0}', space=sflag, size = 0x4, scoped, tag = 'scoped memory for neural_gnn_forward_padded.1']
    #allocation10 [shape = 'u8[32768]{0}', space=vmem, size = 0x8000, scoped, tag = 'input window, operand 6, single buffered']
    #allocation11 [shape = 'u8[32768]{0}', space=vmem, size = 0x8000, scoped, tag = 'input window, operand 8, single buffered']
    #allocation12 [shape = 's32[1]{0}', space=sflag, size = 0x4, scoped, tag = 'scoped memory for neural_gnn_forward_padded.1']
    #allocation13 [shape = 'u8[512]{0}', space=vmem, size = 0x400, scoped, tag = 'input window, operand 9, single buffered']
    #allocation14 [shape = 'u8[32768]{0}', space=vmem, size = 0x8000, scoped, tag = 'input window, operand 10, single buffered']
    #allocation15 [shape = 's32[1]{0}', space=sflag, size = 0x4, scoped, tag = 'scoped memory for neural_gnn_forward_padded.1']
    #allocation16 [shape = 'u8[512]{0}', space=vmem, size = 0x400, scoped, tag = 'input window, operand 11, single buffered']
    #allocation17 [shape = 'u8[131072]{0}', space=vmem, size = 0x20000, scoped, tag = 'output window, operand 0, single buffered']
    %17 = vsyncpa [#allocation3], 0
    %18 = vsyncpa [#allocation6], 0
    %19 = vsyncpa [#allocation9], 0
    %20 = vsyncpa [#allocation12], 0
    %21 = vsyncpa [#allocation15], 0
    %22 = vsyncpa [#allocation4], 0
    // Predicated region
    $region2: #{neural_gnn_forward_padded.1} parent=1 // pred_check
      _
    $region3: #{neural_gnn_forward_padded.1} parent=1 // pred_check_branch
      %24 = sbr.rel (0) target = $region5
    $region4: #{neural_gnn_forward_padded.1} parent=1 // pred_region
      %26 = vsyncadd [#allocation3], 0
      %s27 = sshll.u32 %s0, 4
      %s28 = int_to_ptr.hbm [resolvable:$true] %s27
      %s29 = sshll.u32 [#allocation2], 4
      %s30 = int_to_ptr.vmem [resolvable:$true] %s29
      %35 = dma.hbm_to_vmem [thread:$0]  %s28, 4096, %s30, [#allocation3], 128, 128, 8
    $region5: #{neural_gnn_forward_padded.1} parent=1 // pred_fallthru
      _
    // Predicated region
    $region6: #{neural_gnn_forward_padded.1} parent=1 // pred_check
      _
    $region7: #{neural_gnn_forward_padded.1} parent=1 // pred_check_branch
      %37 = sbr.rel (0) target = $region9
    $region8: #{neural_gnn_forward_padded.1} parent=1 // pred_region
      %39 = vsyncadd [#allocation6], 0
      %s40 = sshll.u32 %s1, 4
      %s41 = int_to_ptr.hbm [resolvable:$true] %s40
      %s42 = sshll.u32 [#allocation5], 4
      %s43 = int_to_ptr.vmem [resolvable:$true] %s42
      %48 = dma.hbm_to_vmem [thread:$0]  %s41, 2048, %s43, [#allocation6], 64, 64, 4
    $region9: #{neural_gnn_forward_padded.1} parent=1 // pred_fallthru
      _
    // Predicated region
    $region10: #{neural_gnn_forward_padded.1} parent=1 // pred_check
      _
    $region11: #{neural_gnn_forward_padded.1} parent=1 // pred_check_branch
      %50 = sbr.rel (0) target = $region13
    $region12: #{neural_gnn_forward_padded.1} parent=1 // pred_region
      %52 = vsyncadd [#allocation6], 0
      %s53 = sshll.u32 %s2, 4
      %s54 = int_to_ptr.hbm [resolvable:$true] %s53
      %s55 = sshll.u32 [#allocation7], 4
      %s56 = int_to_ptr.vmem [resolvable:$true] %s55
      %61 = dma.hbm_to_vmem [thread:$0]  %s54, 1024, %s56, [#allocation6], 64, 64, 4
    $region13: #{neural_gnn_forward_padded.1} parent=1 // pred_fallthru
      _
    // Predicated region
    $region14: #{neural_gnn_forward_padded.1} parent=1 // pred_check
      _
    $region15: #{neural_gnn_forward_padded.1} parent=1 // pred_check_branch
      %63 = sbr.rel (0) target = $region17
    $region16: #{neural_gnn_forward_padded.1} parent=1 // pred_region
      _
    $region17: #{neural_gnn_forward_padded.1} parent=1 // pred_fallthru
      _
    // Predicated region
    $region18: #{neural_gnn_forward_padded.1} parent=1 // pred_check
      _
    $region19: #{neural_gnn_forward_padded.1} parent=1 // pred_check_branch
      %65 = sbr.rel (0) target = $region21
    $region20: #{neural_gnn_forward_padded.1} parent=1 // pred_region
      %67 = vsyncadd [#allocation9], 0
      %s68 = sshll.u32 %s4, 4
      %s69 = int_to_ptr.hbm [resolvable:$true] %s68
      %s70 = sshll.u32 [#allocation8], 4
      %s71 = int_to_ptr.vmem [resolvable:$true] %s70
      %76 = dma.hbm_to_vmem [thread:$0]  %s69, 1024, %s71, [#allocation9], 64, 64, 4
    $region21: #{neural_gnn_forward_padded.1} parent=1 // pred_fallthru
      _
    // Predicated region
    $region22: #{neural_gnn_forward_padded.1} parent=1 // pred_check
      _
    $region23: #{neural_gnn_forward_padded.1} parent=1 // pred_check_branch
      %78 = sbr.rel (0) target = $region25
    $region24: #{neural_gnn_forward_padded.1} parent=1 // pred_region
      _
    $region25: #{neural_gnn_forward_padded.1} parent=1 // pred_fallthru
      _
    // Predicated region
    $region26: #{neural_gnn_forward_padded.1} parent=1 // pred_check
      _
    $region27: #{neural_gnn_forward_padded.1} parent=1 // pred_check_branch
      %80 = sbr.rel (0) target = $region29
    $region28: #{neural_gnn_forward_padded.1} parent=1 // pred_region
      %82 = vsyncadd [#allocation9], 0
      %s83 = sshll.u32 %s6, 4
      %s84 = int_to_ptr.hbm [resolvable:$true] %s83
      %s85 = sshll.u32 [#allocation10], 4
      %s86 = int_to_ptr.vmem [resolvable:$true] %s85
      %91 = dma.hbm_to_vmem [thread:$0]  %s84, 1024, %s86, [#allocation9], 64, 64, 4
    $region29: #{neural_gnn_forward_padded.1} parent=1 // pred_fallthru
      _
    // Predicated region
    $region30: #{neural_gnn_forward_padded.1} parent=1 // pred_check
      _
    $region31: #{neural_gnn_forward_padded.1} parent=1 // pred_check_branch
      %93 = sbr.rel (0) target = $region33
    $region32: #{neural_gnn_forward_padded.1} parent=1 // pred_region
      _
    $region33: #{neural_gnn_forward_padded.1} parent=1 // pred_fallthru
      _
    // Predicated region
    $region34: #{neural_gnn_forward_padded.1} parent=1 // pred_check
      _
    $region35: #{neural_gnn_forward_padded.1} parent=1 // pred_check_branch
      %95 = sbr.rel (0) target = $region37
    $region36: #{neural_gnn_forward_padded.1} parent=1 // pred_region
      %97 = vsyncadd [#allocation12], 0
      %s98 = sshll.u32 %s8, 4
      %s99 = int_to_ptr.hbm [resolvable:$true] %s98
      %s100 = sshll.u32 [#allocation11], 4
      %s101 = int_to_ptr.vmem [resolvable:$true] %s100
      %106 = dma.hbm_to_vmem [thread:$0]  %s99, 1024, %s101, [#allocation12], 64, 64, 4
    $region37: #{neural_gnn_forward_padded.1} parent=1 // pred_fallthru
      _
    // Predicated region
    $region38: #{neural_gnn_forward_padded.1} parent=1 // pred_check
      _
    $region39: #{neural_gnn_forward_padded.1} parent=1 // pred_check_branch
      %108 = sbr.rel (0) target = $region41
    $region40: #{neural_gnn_forward_padded.1} parent=1 // pred_region
      %110 = vsyncadd [#allocation12], 0
      %s112 = sshll.u32 %s9, 4
      %s113 = int_to_ptr.hbm [resolvable:$true] %s112
      %s114 = sshll.u32 [#allocation13], 4
      %s115 = int_to_ptr.vmem [resolvable:$true] %s114
      %117 = dma.hbm_to_vmem [thread:$0]  %s113, 16, %s115, [#allocation12]
    $region41: #{neural_gnn_forward_padded.1} parent=1 // pred_fallthru
      _
    // Predicated region
    $region42: #{neural_gnn_forward_padded.1} parent=1 // pred_check
      _
    $region43: #{neural_gnn_forward_padded.1} parent=1 // pred_check_branch
      %119 = sbr.rel (0) target = $region45
    $region44: #{neural_gnn_forward_padded.1} parent=1 // pred_region
      %121 = vsyncadd [#allocation15], 0
      %s122 = sshll.u32 %s10, 4
      %s123 = int_to_ptr.hbm [resolvable:$true] %s122
      %s124 = sshll.u32 [#allocation14], 4
      %s125 = int_to_ptr.vmem [resolvable:$true] %s124
      %130 = dma.hbm_to_vmem [thread:$0]  %s123, 1024, %s125, [#allocation15], 64, 64, 4
    $region45: #{neural_gnn_forward_padded.1} parent=1 // pred_fallthru
      _
    // Predicated region
    $region46: #{neural_gnn_forward_padded.1} parent=1 // pred_check
      _
    $region47: #{neural_gnn_forward_padded.1} parent=1 // pred_check_branch
      %132 = sbr.rel (0) target = $region49
    $region48: #{neural_gnn_forward_padded.1} parent=1 // pred_region
      %134 = vsyncadd [#allocation15], 0
      %s136 = sshll.u32 %s11, 4
      %s137 = int_to_ptr.hbm [resolvable:$true] %s136
      %s138 = sshll.u32 [#allocation16], 4
      %s139 = int_to_ptr.vmem [resolvable:$true] %s138
      %141 = dma.hbm_to_vmem [thread:$0]  %s137, 16, %s139, [#allocation15]
    $region49: #{neural_gnn_forward_padded.1} parent=1 // pred_fallthru
      _
    // Predicated region
    $region50: #{neural_gnn_forward_padded.1} parent=1 // pred_check
      _
    $region51: #{neural_gnn_forward_padded.1} parent=1 // pred_check_branch
      %143 = sbr.rel (0) target = $region53
    $region52: #{neural_gnn_forward_padded.1} parent=1 // pred_region
      %145 = dma.done [#allocation3], 4096
    $region53: #{neural_gnn_forward_padded.1} parent=1 // pred_fallthru
      _
    // Predicated region
    $region54: #{neural_gnn_forward_padded.1} parent=1 // pred_check
      _
    $region55: #{neural_gnn_forward_padded.1} parent=1 // pred_check_branch
      %147 = sbr.rel (0) target = $region57
    $region56: #{neural_gnn_forward_padded.1} parent=1 // pred_region
      %149 = dma.done [#allocation6], 2048
    $region57: #{neural_gnn_forward_padded.1} parent=1 // pred_fallthru
      _
    // Predicated region
    $region58: #{neural_gnn_forward_padded.1} parent=1 // pred_check
      _
    $region59: #{neural_gnn_forward_padded.1} parent=1 // pred_check_branch
      %151 = sbr.rel (0) target = $region61
    $region60: #{neural_gnn_forward_padded.1} parent=1 // pred_region
      %153 = dma.done [#allocation6], 1024
    $region61: #{neural_gnn_forward_padded.1} parent=1 // pred_fallthru
      _
    // Predicated region
    $region62: #{neural_gnn_forward_padded.1} parent=1 // pred_check
      _
    $region63: #{neural_gnn_forward_padded.1} parent=1 // pred_check_branch
      %155 = sbr.rel (0) target = $region65
    $region64: #{neural_gnn_forward_padded.1} parent=1 // pred_region
      %157 = dma.done [#allocation9], 1024
    $region65: #{neural_gnn_forward_padded.1} parent=1 // pred_fallthru
      _
    // Predicated region
    $region66: #{neural_gnn_forward_padded.1} parent=1 // pred_check
      _
    $region67: #{neural_gnn_forward_padded.1} parent=1 // pred_check_branch
      %159 = sbr.rel (0) target = $region69
    $region68: #{neural_gnn_forward_padded.1} parent=1 // pred_region
      %161 = dma.done [#allocation9], 1024
    $region69: #{neural_gnn_forward_padded.1} parent=1 // pred_fallthru
      _
    // Predicated region
    $region70: #{neural_gnn_forward_padded.1} parent=1 // pred_check
      _
    $region71: #{neural_gnn_forward_padded.1} parent=1 // pred_check_branch
      %163 = sbr.rel (0) target = $region73
    $region72: #{neural_gnn_forward_padded.1} parent=1 // pred_region
      %165 = dma.done [#allocation12], 1024
    $region73: #{neural_gnn_forward_padded.1} parent=1 // pred_fallthru
      _
    // Predicated region
    $region74: #{neural_gnn_forward_padded.1} parent=1 // pred_check
      _
    $region75: #{neural_gnn_forward_padded.1} parent=1 // pred_check_branch
      %167 = sbr.rel (0) target = $region77
    $region76: #{neural_gnn_forward_padded.1} parent=1 // pred_region
      %169 = dma.done [#allocation12], 16
    $region77: #{neural_gnn_forward_padded.1} parent=1 // pred_fallthru
      _
    // Predicated region
    $region78: #{neural_gnn_forward_padded.1} parent=1 // pred_check
      _
    $region79: #{neural_gnn_forward_padded.1} parent=1 // pred_check_branch
      %171 = sbr.rel (0) target = $region81
    $region80: #{neural_gnn_forward_padded.1} parent=1 // pred_region
      %173 = dma.done [#allocation15], 1024
    $region81: #{neural_gnn_forward_padded.1} parent=1 // pred_fallthru
      _
    // Predicated region
    $region82: #{neural_gnn_forward_padded.1} parent=1 // pred_check
      _
    $region83: #{neural_gnn_forward_padded.1} parent=1 // pred_check_branch
      %175 = sbr.rel (0) target = $region85
    $region84: #{neural_gnn_forward_padded.1} parent=1 // pred_region
      %177 = dma.done [#allocation15], 16
    $region85: #{neural_gnn_forward_padded.1} parent=1 // pred_fallthru
      _
    %v178 = vld [vmem:[#allocation2] sm:$0xff]
    %v179 = vld [vmem:[#allocation2 + $0x8] sm:$0xff]
    %v180 = vld [vmem:[#allocation2 + $0x10] sm:$0xff]
    %v181 = vld [vmem:[#allocation2 + $0x18] sm:$0xff]
    %v182 = vld [vmem:[#allocation2 + $0x20] sm:$0xff]
    %v183 = vld [vmem:[#allocation2 + $0x28] sm:$0xff]
    %v184 = vld [vmem:[#allocation2 + $0x30] sm:$0xff]
    %v185 = vld [vmem:[#allocation2 + $0x38] sm:$0xff]
    %v186 = vld [vmem:[#allocation2 + $0x40] sm:$0xff]
    %v187 = vld [vmem:[#allocation2 + $0x48] sm:$0xff]
    %v188 = vld [vmem:[#allocation2 + $0x50] sm:$0xff]
    %v189 = vld [vmem:[#allocation2 + $0x58] sm:$0xff]
    %v190 = vld [vmem:[#allocation2 + $0x60] sm:$0xff]
    %v191 = vld [vmem:[#allocation2 + $0x68] sm:$0xff]
    %v192 = vld [vmem:[#allocation2 + $0x70] sm:$0xff]
    %v193 = vld [vmem:[#allocation2 + $0x78] sm:$0xff]
    %v194 = vld [vmem:[#allocation2 + $0x80] sm:$0xff]
    %v195 = vld [vmem:[#allocation2 + $0x88] sm:$0xff]
    %v196 = vld [vmem:[#allocation2 + $0x90] sm:$0xff]
    %v197 = vld [vmem:[#allocation2 + $0x98] sm:$0xff]
    %v198 = vld [vmem:[#allocation2 + $0xa0] sm:$0xff]
    %v199 = vld [vmem:[#allocation2 + $0xa8] sm:$0xff]
    %v200 = vld [vmem:[#allocation2 + $0xb0] sm:$0xff]
    %v201 = vld [vmem:[#allocation2 + $0xb8] sm:$0xff]
    %v202 = vld [vmem:[#allocation2 + $0xc0] sm:$0xff]
    %v203 = vld [vmem:[#allocation2 + $0xc8] sm:$0xff]
    %v204 = vld [vmem:[#allocation2 + $0xd0] sm:$0xff]
    %v205 = vld [vmem:[#allocation2 + $0xd8] sm:$0xff]
    %v206 = vld [vmem:[#allocation2 + $0xe0] sm:$0xff]
    %v207 = vld [vmem:[#allocation2 + $0xe8] sm:$0xff]
    %v208 = vld [vmem:[#allocation2 + $0xf0] sm:$0xff]
    %v209 = vld [vmem:[#allocation2 + $0xf8] sm:$0xff]
    %v210 = vld [vmem:[#allocation5] sm:$0xf]
    %v211 = vld [vmem:[#allocation5 + $0x4] sm:$0xf]
    %v212 = vld [vmem:[#allocation5 + $0x8] sm:$0xf]
    %v213 = vld [vmem:[#allocation5 + $0xc] sm:$0xf]
    %v214 = vld [vmem:[#allocation5 + $0x10] sm:$0xf]
    %v215 = vld [vmem:[#allocation5 + $0x14] sm:$0xf]
    %v216 = vld [vmem:[#allocation5 + $0x18] sm:$0xf]
    %v217 = vld [vmem:[#allocation5 + $0x1c] sm:$0xf]
    %v218 = vld [vmem:[#allocation5 + $0x20] sm:$0xf]
    %v219 = vld [vmem:[#allocation5 + $0x24] sm:$0xf]
    %v220 = vld [vmem:[#allocation5 + $0x28] sm:$0xf]
    %v221 = vld [vmem:[#allocation5 + $0x2c] sm:$0xf]
    %v222 = vld [vmem:[#allocation5 + $0x30] sm:$0xf]
    %v223 = vld [vmem:[#allocation5 + $0x34] sm:$0xf]
    %v224 = vld [vmem:[#allocation5 + $0x38] sm:$0xf]
    %v225 = vld [vmem:[#allocation5 + $0x3c] sm:$0xf]
    %v226 = vld [vmem:[#allocation5 + $0x40] sm:$0xf]
    %v227 = vld [vmem:[#allocation5 + $0x44] sm:$0xf]
    %v228 = vld [vmem:[#allocation5 + $0x48] sm:$0xf]
    %v229 = vld [vmem:[#allocation5 + $0x4c] sm:$0xf]
    %v230 = vld [vmem:[#allocation5 + $0x50] sm:$0xf]
    %v231 = vld [vmem:[#allocation5 + $0x54] sm:$0xf]
    %v232 = vld [vmem:[#allocation5 + $0x58] sm:$0xf]
    %v233 = vld [vmem:[#allocation5 + $0x5c] sm:$0xf]
    %v234 = vld [vmem:[#allocation5 + $0x60] sm:$0xf]
    %v235 = vld [vmem:[#allocation5 + $0x64] sm:$0xf]
    %v236 = vld [vmem:[#allocation5 + $0x68] sm:$0xf]
    %v237 = vld [vmem:[#allocation5 + $0x6c] sm:$0xf]
    %v238 = vld [vmem:[#allocation5 + $0x70] sm:$0xf]
    %v239 = vld [vmem:[#allocation5 + $0x74] sm:$0xf]
    %v240 = vld [vmem:[#allocation5 + $0x78] sm:$0xf]
    %v241 = vld [vmem:[#allocation5 + $0x7c] sm:$0xf]
    %v242 = vld [vmem:[#allocation7] sm:$0xf]
    %v243 = vld [vmem:[#allocation7 + $0x4] sm:$0xf]
    %v244 = vld [vmem:[#allocation7 + $0x8] sm:$0xf]
    %v245 = vld [vmem:[#allocation7 + $0xc] sm:$0xf]
    %v246 = vld [vmem:[#allocation7 + $0x10] sm:$0xf]
    %v247 = vld [vmem:[#allocation7 + $0x14] sm:$0xf]
    %v248 = vld [vmem:[#allocation7 + $0x18] sm:$0xf]
    %v249 = vld [vmem:[#allocation7 + $0x1c] sm:$0xf]
    %v250 = vld [vmem:[#allocation7 + $0x20] sm:$0xf]
    %v251 = vld [vmem:[#allocation7 + $0x24] sm:$0xf]
    %v252 = vld [vmem:[#allocation7 + $0x28] sm:$0xf]
    %v253 = vld [vmem:[#allocation7 + $0x2c] sm:$0xf]
    %v254 = vld [vmem:[#allocation7 + $0x30] sm:$0xf]
    %v255 = vld [vmem:[#allocation7 + $0x34] sm:$0xf]
    %v256 = vld [vmem:[#allocation7 + $0x38] sm:$0xf]
    %v257 = vld [vmem:[#allocation7 + $0x3c] sm:$0xf]
    %v290 = vunpack.c.l.b16 %v210
    %v291 = vunpack.c.l.b16 %v211
    %v292 = vunpack.c.l.b16 %v212
    %v293 = vunpack.c.l.b16 %v213
    %v294 = vunpack.c.l.b16 %v214
    %v295 = vunpack.c.l.b16 %v215
    %v296 = vunpack.c.l.b16 %v216
    %v297 = vunpack.c.l.b16 %v217
    %v298 = vunpack.c.l.b16 %v218
    %v299 = vunpack.c.l.b16 %v219
    %v300 = vunpack.c.l.b16 %v220
    %v301 = vunpack.c.l.b16 %v221
    %v302 = vunpack.c.l.b16 %v222
    %v303 = vunpack.c.l.b16 %v223
    %v304 = vunpack.c.l.b16 %v224
    %v305 = vunpack.c.l.b16 %v225
    %v306 = vunpack.c.l.b16 %v226
    %v307 = vunpack.c.l.b16 %v227
    %v308 = vunpack.c.l.b16 %v228
    %v309 = vunpack.c.l.b16 %v229
    %v310 = vunpack.c.l.b16 %v230
    %v311 = vunpack.c.l.b16 %v231
    %v312 = vunpack.c.l.b16 %v232
    %v313 = vunpack.c.l.b16 %v233
    %v314 = vunpack.c.l.b16 %v234
    %v315 = vunpack.c.l.b16 %v235
    %v316 = vunpack.c.l.b16 %v236
    %v317 = vunpack.c.l.b16 %v237
    %v318 = vunpack.c.l.b16 %v238
    %v319 = vunpack.c.l.b16 %v239
    %v320 = vunpack.c.l.b16 %v240
    %v321 = vunpack.c.l.b16 %v241
    %v322 = vpack.c.b16 %v291, %v290
    %v323 = vpack.c.b16 %v293, %v292
    %v324 = vpack.c.b16 %v295, %v294
    %v325 = vpack.c.b16 %v297, %v296
    %v326 = vpack.c.b16 %v299, %v298
    %v327 = vpack.c.b16 %v301, %v300
    %v328 = vpack.c.b16 %v303, %v302
    %v329 = vpack.c.b16 %v305, %v304
    %v330 = vpack.c.b16 %v307, %v306
    %v331 = vpack.c.b16 %v309, %v308
    %v332 = vpack.c.b16 %v311, %v310
    %v333 = vpack.c.b16 %v313, %v312
    %v334 = vpack.c.b16 %v315, %v314
    %v335 = vpack.c.b16 %v317, %v316
    %v336 = vpack.c.b16 %v319, %v318
    %v337 = vpack.c.b16 %v321, %v320
    %v370 = vunpack.c.l.b16 %v242
    %v371 = vunpack.c.l.b16 %v243
    %v372 = vunpack.c.l.b16 %v244
    %v373 = vunpack.c.l.b16 %v245
    %v374 = vunpack.c.l.b16 %v246
    %v375 = vunpack.c.l.b16 %v247
    %v376 = vunpack.c.l.b16 %v248
    %v377 = vunpack.c.l.b16 %v249
    %v378 = vunpack.c.l.b16 %v250
    %v379 = vunpack.c.l.b16 %v251
    %v380 = vunpack.c.l.b16 %v252
    %v381 = vunpack.c.l.b16 %v253
    %v382 = vunpack.c.l.b16 %v254
    %v383 = vunpack.c.l.b16 %v255
    %v384 = vunpack.c.l.b16 %v256
    %v385 = vunpack.c.l.b16 %v257
    %v386 = vpack.c.b16 %v371, %v370
    %v387 = vpack.c.b16 %v373, %v372
    %v388 = vpack.c.b16 %v375, %v374
    %v389 = vpack.c.b16 %v377, %v376
    %v390 = vpack.c.b16 %v379, %v378
    %v391 = vpack.c.b16 %v381, %v380
    %v392 = vpack.c.b16 %v383, %v382
    %v393 = vpack.c.b16 %v385, %v384
    %402 = vmatpush.bf16.msra.mxu0 %v393
    %403 = vmatpush.bf16.msra.mxu0 %v392
    %404 = vmatpush.bf16.msra.mxu0 %v391
    %405 = vmatpush.bf16.msra.mxu0 %v390
    %406 = vmatpush.bf16.msra.mxu0 %v389
    %407 = vmatpush.bf16.msra.mxu0 %v388
    %408 = vmatpush.bf16.msra.mxu0 %v387
    %409 = vmatpush.bf16.msra.mxu0 %v386
    %410 = vmatmul.bf16.gmra.mxu0 %v322
    %v411 = vpop.f32.mrf.mxu0
    %v412 = vadd.f32 0.0, %v411
    %v413 = vpop.f32.mrf.mxu0
    %v414 = vadd.f32 0.0, %v413
    %415 = vmatmul.bf16.gmra.mxu0 %v323
    %v416 = vpop.f32.mrf.mxu0
    %v417 = vadd.f32 0.0, %v416
    %v418 = vpop.f32.mrf.mxu0
    %v419 = vadd.f32 0.0, %v418
    %420 = vmatmul.bf16.gmra.mxu0 %v324
    %v421 = vpop.f32.mrf.mxu0
    %v422 = vadd.f32 0.0, %v421
    %v423 = vpop.f32.mrf.mxu0
    %v424 = vadd.f32 0.0, %v423
    %425 = vmatmul.bf16.gmra.mxu0 %v325
    %v426 = vpop.f32.mrf.mxu0
    %v427 = vadd.f32 0.0, %v426
    %v428 = vpop.f32.mrf.mxu0
    %v429 = vadd.f32 0.0, %v428
    %430 = vmatmul.bf16.gmra.mxu0 %v326
    %v431 = vpop.f32.mrf.mxu0
    %v432 = vadd.f32 0.0, %v431
    %v433 = vpop.f32.mrf.mxu0
    %v434 = vadd.f32 0.0, %v433
    %435 = vmatmul.bf16.gmra.mxu0 %v327
    %v436 = vpop.f32.mrf.mxu0
    %v437 = vadd.f32 0.0, %v436
    %v438 = vpop.f32.mrf.mxu0
    %v439 = vadd.f32 0.0, %v438
    %440 = vmatmul.bf16.gmra.mxu0 %v328
    %v441 = vpop.f32.mrf.mxu0
    %v442 = vadd.f32 0.0, %v441
    %v443 = vpop.f32.mrf.mxu0
    %v444 = vadd.f32 0.0, %v443
    %445 = vmatmul.bf16.gmra.mxu0 %v329
    %v446 = vpop.f32.mrf.mxu0
    %v447 = vadd.f32 0.0, %v446
    %v448 = vpop.f32.mrf.mxu0
    %v449 = vadd.f32 0.0, %v448
    %450 = vmatmul.bf16.gmra.mxu0 %v330
    %v451 = vpop.f32.mrf.mxu0
    %v452 = vadd.f32 0.0, %v451
    %v453 = vpop.f32.mrf.mxu0
    %v454 = vadd.f32 0.0, %v453
    %455 = vmatmul.bf16.gmra.mxu0 %v331
    %v456 = vpop.f32.mrf.mxu0
    %v457 = vadd.f32 0.0, %v456
    %v458 = vpop.f32.mrf.mxu0
    %v459 = vadd.f32 0.0, %v458
    %460 = vmatmul.bf16.gmra.mxu0 %v332
    %v461 = vpop.f32.mrf.mxu0
    %v462 = vadd.f32 0.0, %v461
    %v463 = vpop.f32.mrf.mxu0
    %v464 = vadd.f32 0.0, %v463
    %465 = vmatmul.bf16.gmra.mxu0 %v333
    %v466 = vpop.f32.mrf.mxu0
    %v467 = vadd.f32 0.0, %v466
    %v468 = vpop.f32.mrf.mxu0
    %v469 = vadd.f32 0.0, %v468
    %470 = vmatmul.bf16.gmra.mxu0 %v334
    %v471 = vpop.f32.mrf.mxu0
    %v472 = vadd.f32 0.0, %v471
    %v473 = vpop.f32.mrf.mxu0
    %v474 = vadd.f32 0.0, %v473
    %475 = vmatmul.bf16.gmra.mxu0 %v335
    %v476 = vpop.f32.mrf.mxu0
    %v477 = vadd.f32 0.0, %v476
    %v478 = vpop.f32.mrf.mxu0
    %v479 = vadd.f32 0.0, %v478
    %480 = vmatmul.bf16.gmra.mxu0 %v336
    %v481 = vpop.f32.mrf.mxu0
    %v482 = vadd.f32 0.0, %v481
    %v483 = vpop.f32.mrf.mxu0
    %v484 = vadd.f32 0.0, %v483
    %485 = vmatmul.bf16.gmra.mxu0 %v337
    %v486 = vpop.f32.mrf.mxu0
    %v487 = vadd.f32 0.0, %v486
    %v488 = vpop.f32.mrf.mxu0
    %v489 = vadd.f32 0.0, %v488
    %490 = vdwg.mxu0
    %v491 = vpack.c.bf16 %v414, %v412
    %v492 = vpack.c.bf16 %v419, %v417
    %v493 = vpack.c.bf16 %v424, %v422
    %v494 = vpack.c.bf16 %v429, %v427
    %v495 = vpack.c.bf16 %v434, %v432
    %v496 = vpack.c.bf16 %v439, %v437
    %v497 = vpack.c.bf16 %v444, %v442
    %v498 = vpack.c.bf16 %v449, %v447
    %v499 = vpack.c.bf16 %v454, %v452
    %v500 = vpack.c.bf16 %v459, %v457
    %v501 = vpack.c.bf16 %v464, %v462
    %v502 = vpack.c.bf16 %v469, %v467
    %v503 = vpack.c.bf16 %v474, %v472
    %v504 = vpack.c.bf16 %v479, %v477
    %v505 = vpack.c.bf16 %v484, %v482
    %v506 = vpack.c.bf16 %v489, %v487
    %v507 = vld [vmem:[%s3] sm:$0x1]
    %v509 = vperm.slane %v507, 0
    %v543 = vunpack.c.l.b16 %v178
    %v544 = vunpack.c.h.b16 %v178
    %v545 = vunpack.c.l.b16 %v179
    %v546 = vunpack.c.h.b16 %v179
    %v547 = vunpack.c.l.b16 %v180
    %v548 = vunpack.c.h.b16 %v180
    %v549 = vunpack.c.l.b16 %v181
    %v550 = vunpack.c.h.b16 %v181
    %v551 = vunpack.c.l.b16 %v182
    %v552 = vunpack.c.h.b16 %v182
    %v553 = vunpack.c.l.b16 %v183
    %v554 = vunpack.c.h.b16 %v183
    %v555 = vunpack.c.l.b16 %v184
    %v556 = vunpack.c.h.b16 %v184
    %v557 = vunpack.c.l.b16 %v185
    %v558 = vunpack.c.h.b16 %v185
    %v559 = vunpack.c.l.b16 %v186
    %v560 = vunpack.c.h.b16 %v186
    %v561 = vunpack.c.l.b16 %v187
    %v562 = vunpack.c.h.b16 %v187
    %v563 = vunpack.c.l.b16 %v188
    %v564 = vunpack.c.h.b16 %v188
    %v565 = vunpack.c.l.b16 %v189
    %v566 = vunpack.c.h.b16 %v189
    %v567 = vunpack.c.l.b16 %v190
    %v568 = vunpack.c.h.b16 %v190
    %v569 = vunpack.c.l.b16 %v191
    %v570 = vunpack.c.h.b16 %v191
    %v571 = vunpack.c.l.b16 %v192
    %v572 = vunpack.c.h.b16 %v192
    %v573 = vunpack.c.l.b16 %v193
    %v574 = vunpack.c.h.b16 %v193
    %v575 = vunpack.c.l.b16 %v194
    %v576 = vunpack.c.h.b16 %v194
    %v577 = vunpack.c.l.b16 %v195
    %v578 = vunpack.c.h.b16 %v195
    %v579 = vunpack.c.l.b16 %v196
    %v580 = vunpack.c.h.b16 %v196
    %v581 = vunpack.c.l.b16 %v197
    %v582 = vunpack.c.h.b16 %v197
    %v583 = vunpack.c.l.b16 %v198
    %v584 = vunpack.c.h.b16 %v198
    %v585 = vunpack.c.l.b16 %v199
    %v586 = vunpack.c.h.b16 %v199
    %v587 = vunpack.c.l.b16 %v200
    %v588 = vunpack.c.h.b16 %v200
    %v589 = vunpack.c.l.b16 %v201
    %v590 = vunpack.c.h.b16 %v201
    %v591 = vunpack.c.l.b16 %v202
    %v592 = vunpack.c.h.b16 %v202
    %v593 = vunpack.c.l.b16 %v203
    %v594 = vunpack.c.h.b16 %v203
    %v595 = vunpack.c.l.b16 %v204
    %v596 = vunpack.c.h.b16 %v204
    %v597 = vunpack.c.l.b16 %v205
    %v598 = vunpack.c.h.b16 %v205
    %v599 = vunpack.c.l.b16 %v206
    %v600 = vunpack.c.h.b16 %v206
    %v601 = vunpack.c.l.b16 %v207
    %v602 = vunpack.c.h.b16 %v207
    %v603 = vunpack.c.l.b16 %v208
    %v604 = vunpack.c.h.b16 %v208
    %v605 = vunpack.c.l.b16 %v209
    %v606 = vunpack.c.h.b16 %v209
    %v607 = vpack.c.b16 %v545, %v543
    %v608 = vpack.c.b16 %v546, %v544
    %v609 = vpack.c.b16 %v549, %v547
    %v610 = vpack.c.b16 %v550, %v548
    %v611 = vpack.c.b16 %v553, %v551
    %v612 = vpack.c.b16 %v554, %v552
    %v613 = vpack.c.b16 %v557, %v555
    %v614 = vpack.c.b16 %v558, %v556
    %v615 = vpack.c.b16 %v561, %v559
    %v616 = vpack.c.b16 %v562, %v560
    %v617 = vpack.c.b16 %v565, %v563
    %v618 = vpack.c.b16 %v566, %v564
    %v619 = vpack.c.b16 %v569, %v567
    %v620 = vpack.c.b16 %v570, %v568
    %v621 = vpack.c.b16 %v573, %v571
    %v622 = vpack.c.b16 %v574, %v572
    %v623 = vpack.c.b16 %v577, %v575
    %v624 = vpack.c.b16 %v578, %v576
    %v625 = vpack.c.b16 %v581, %v579
    %v626 = vpack.c.b16 %v582, %v580
    %v627 = vpack.c.b16 %v585, %v583
    %v628 = vpack.c.b16 %v586, %v584
    %v629 = vpack.c.b16 %v589, %v587
    %v630 = vpack.c.b16 %v590, %v588
    %v631 = vpack.c.b16 %v593, %v591
    %v632 = vpack.c.b16 %v594, %v592
    %v633 = vpack.c.b16 %v597, %v595
    %v634 = vpack.c.b16 %v598, %v596
    %v635 = vpack.c.b16 %v601, %v599
    %v636 = vpack.c.b16 %v602, %v600
    %v637 = vpack.c.b16 %v605, %v603
    %v638 = vpack.c.b16 %v606, %v604
    %671 = vmatpush.bf16.msra.mxu0 %v498
    %672 = vmatpush.bf16.msra.mxu0 %v497
    %673 = vmatpush.bf16.msra.mxu0 %v496
    %674 = vmatpush.bf16.msra.mxu0 %v495
    %675 = vmatpush.bf16.msra.mxu0 %v494
    %676 = vmatpush.bf16.msra.mxu0 %v493
    %677 = vmatpush.bf16.msra.mxu0 %v492
    %678 = vmatpush.bf16.msra.mxu0 %v491
    %679 = vmatmul.bf16.gmra.mxu0 %v607
    %v680 = vpop.f32.mrf.mxu0
    %v681 = vadd.f32 %v509, %v680
    %v682 = vpop.f32.mrf.mxu0
    %v683 = vadd.f32 %v509, %v682
    %684 = vmatmul.bf16.gmra.mxu0 %v609
    %v685 = vpop.f32.mrf.mxu0
    %v686 = vadd.f32 %v509, %v685
    %v687 = vpop.f32.mrf.mxu0
    %v688 = vadd.f32 %v509, %v687
    %689 = vmatmul.bf16.gmra.mxu0 %v611
    %v690 = vpop.f32.mrf.mxu0
    %v691 = vadd.f32 %v509, %v690
    %v692 = vpop.f32.mrf.mxu0
    %v693 = vadd.f32 %v509, %v692
    %694 = vmatmul.bf16.gmra.mxu0 %v613
    %v695 = vpop.f32.mrf.mxu0
    %v696 = vadd.f32 %v509, %v695
    %v697 = vpop.f32.mrf.mxu0
    %v698 = vadd.f32 %v509, %v697
    %699 = vmatmul.bf16.gmra.mxu0 %v615
    %v700 = vpop.f32.mrf.mxu0
    %v701 = vadd.f32 %v509, %v700
    %v702 = vpop.f32.mrf.mxu0
    %v703 = vadd.f32 %v509, %v702
    %704 = vmatmul.bf16.gmra.mxu0 %v617
    %v705 = vpop.f32.mrf.mxu0
    %v706 = vadd.f32 %v509, %v705
    %v707 = vpop.f32.mrf.mxu0
    %v708 = vadd.f32 %v509, %v707
    %709 = vmatmul.bf16.gmra.mxu0 %v619
    %v710 = vpop.f32.mrf.mxu0
    %v711 = vadd.f32 %v509, %v710
    %v712 = vpop.f32.mrf.mxu0
    %v713 = vadd.f32 %v509, %v712
    %714 = vmatmul.bf16.gmra.mxu0 %v621
    %v715 = vpop.f32.mrf.mxu0
    %v716 = vadd.f32 %v509, %v715
    %v717 = vpop.f32.mrf.mxu0
    %v718 = vadd.f32 %v509, %v717
    %719 = vmatmul.bf16.gmra.mxu0 %v623
    %v720 = vpop.f32.mrf.mxu0
    %v721 = vadd.f32 %v509, %v720
    %v722 = vpop.f32.mrf.mxu0
    %v723 = vadd.f32 %v509, %v722
    %724 = vmatmul.bf16.gmra.mxu0 %v625
    %v725 = vpop.f32.mrf.mxu0
    %v726 = vadd.f32 %v509, %v725
    %v727 = vpop.f32.mrf.mxu0
    %v728 = vadd.f32 %v509, %v727
    %729 = vmatmul.bf16.gmra.mxu0 %v627
    %v730 = vpop.f32.mrf.mxu0
    %v731 = vadd.f32 %v509, %v730
    %v732 = vpop.f32.mrf.mxu0
    %v733 = vadd.f32 %v509, %v732
    %734 = vmatmul.bf16.gmra.mxu0 %v629
    %v735 = vpop.f32.mrf.mxu0
    %v736 = vadd.f32 %v509, %v735
    %v737 = vpop.f32.mrf.mxu0
    %v738 = vadd.f32 %v509, %v737
    %739 = vmatmul.bf16.gmra.mxu0 %v631
    %v740 = vpop.f32.mrf.mxu0
    %v741 = vadd.f32 %v509, %v740
    %v742 = vpop.f32.mrf.mxu0
    %v743 = vadd.f32 %v509, %v742
    %744 = vmatmul.bf16.gmra.mxu0 %v633
    %v745 = vpop.f32.mrf.mxu0
    %v746 = vadd.f32 %v509, %v745
    %v747 = vpop.f32.mrf.mxu0
    %v748 = vadd.f32 %v509, %v747
    %749 = vmatmul.bf16.gmra.mxu0 %v635
    %v750 = vpop.f32.mrf.mxu0
    %v751 = vadd.f32 %v509, %v750
    %v752 = vpop.f32.mrf.mxu0
    %v753 = vadd.f32 %v509, %v752
    %754 = vmatmul.bf16.gmra.mxu0 %v637
    %v755 = vpop.f32.mrf.mxu0
    %v756 = vadd.f32 %v509, %v755
    %v757 = vpop.f32.mrf.mxu0
    %v758 = vadd.f32 %v509, %v757
    %759 = vdwg.mxu0
    %760 = vmatpush.bf16.msra.mxu0 %v506
    %761 = vmatpush.bf16.msra.mxu0 %v505
    %762 = vmatpush.bf16.msra.mxu0 %v504
    %763 = vmatpush.bf16.msra.mxu0 %v503
    %764 = vmatpush.bf16.msra.mxu0 %v502
    %765 = vmatpush.bf16.msra.mxu0 %v501
    %766 = vmatpush.bf16.msra.mxu0 %v500
    %767 = vmatpush.bf16.msra.mxu0 %v499
    %768 = vmatmul.bf16.gmra.mxu0 %v608
    %v769 = vpop.f32.mrf.mxu0
    %v770 = vadd.f32 %v681, %v769
    %v771 = vpop.f32.mrf.mxu0
    %v772 = vadd.f32 %v683, %v771
    %773 = vmatmul.bf16.gmra.mxu0 %v610
    %v774 = vpop.f32.mrf.mxu0
    %v775 = vadd.f32 %v686, %v774
    %v776 = vpop.f32.mrf.mxu0
    %v777 = vadd.f32 %v688, %v776
    %778 = vmatmul.bf16.gmra.mxu0 %v612
    %v779 = vpop.f32.mrf.mxu0
    %v780 = vadd.f32 %v691, %v779
    %v781 = vpop.f32.mrf.mxu0
    %v782 = vadd.f32 %v693, %v781
    %783 = vmatmul.bf16.gmra.mxu0 %v614
    %v784 = vpop.f32.mrf.mxu0
    %v785 = vadd.f32 %v696, %v784
    %v786 = vpop.f32.mrf.mxu0
    %v787 = vadd.f32 %v698, %v786
    %788 = vmatmul.bf16.gmra.mxu0 %v616
    %v789 = vpop.f32.mrf.mxu0
    %v790 = vadd.f32 %v701, %v789
    %v791 = vpop.f32.mrf.mxu0
    %v792 = vadd.f32 %v703, %v791
    %793 = vmatmul.bf16.gmra.mxu0 %v618
    %v794 = vpop.f32.mrf.mxu0
    %v795 = vadd.f32 %v706, %v794
    %v796 = vpop.f32.mrf.mxu0
    %v797 = vadd.f32 %v708, %v796
    %798 = vmatmul.bf16.gmra.mxu0 %v620
    %v799 = vpop.f32.mrf.mxu0
    %v800 = vadd.f32 %v711, %v799
    %v801 = vpop.f32.mrf.mxu0
    %v802 = vadd.f32 %v713, %v801
    %803 = vmatmul.bf16.gmra.mxu0 %v622
    %v804 = vpop.f32.mrf.mxu0
    %v805 = vadd.f32 %v716, %v804
    %v806 = vpop.f32.mrf.mxu0
    %v807 = vadd.f32 %v718, %v806
    %808 = vmatmul.bf16.gmra.mxu0 %v624
    %v809 = vpop.f32.mrf.mxu0
    %v810 = vadd.f32 %v721, %v809
    %v811 = vpop.f32.mrf.mxu0
    %v812 = vadd.f32 %v723, %v811
    %813 = vmatmul.bf16.gmra.mxu0 %v626
    %v814 = vpop.f32.mrf.mxu0
    %v815 = vadd.f32 %v726, %v814
    %v816 = vpop.f32.mrf.mxu0
    %v817 = vadd.f32 %v728, %v816
    %818 = vmatmul.bf16.gmra.mxu0 %v628
    %v819 = vpop.f32.mrf.mxu0
    %v820 = vadd.f32 %v731, %v819
    %v821 = vpop.f32.mrf.mxu0
    %v822 = vadd.f32 %v733, %v821
    %823 = vmatmul.bf16.gmra.mxu0 %v630
    %v824 = vpop.f32.mrf.mxu0
    %v825 = vadd.f32 %v736, %v824
    %v826 = vpop.f32.mrf.mxu0
    %v827 = vadd.f32 %v738, %v826
    %828 = vmatmul.bf16.gmra.mxu0 %v632
    %v829 = vpop.f32.mrf.mxu0
    %v830 = vadd.f32 %v741, %v829
    %v831 = vpop.f32.mrf.mxu0
    %v832 = vadd.f32 %v743, %v831
    %833 = vmatmul.bf16.gmra.mxu0 %v634
    %v834 = vpop.f32.mrf.mxu0
    %v835 = vadd.f32 %v746, %v834
    %v836 = vpop.f32.mrf.mxu0
    %v837 = vadd.f32 %v748, %v836
    %838 = vmatmul.bf16.gmra.mxu0 %v636
    %v839 = vpop.f32.mrf.mxu0
    %v840 = vadd.f32 %v751, %v839
    %v841 = vpop.f32.mrf.mxu0
    %v842 = vadd.f32 %v753, %v841
    %843 = vmatmul.bf16.gmra.mxu0 %v638
    %v844 = vpop.f32.mrf.mxu0
    %v845 = vadd.f32 %v756, %v844
    %v846 = vpop.f32.mrf.mxu0
    %v847 = vadd.f32 %v758, %v846
    %848 = vdwg.mxu0
    %v849 = vmax.f32 %v770, 0.0
    %v850 = vmax.f32 %v772, 0.0
    %v851 = vmax.f32 %v775, 0.0
    %v852 = vmax.f32 %v777, 0.0
    %v853 = vmax.f32 %v780, 0.0
    %v854 = vmax.f32 %v782, 0.0
    %v855 = vmax.f32 %v785, 0.0
    %v856 = vmax.f32 %v787, 0.0
    %v857 = vmax.f32 %v790, 0.0
    %v858 = vmax.f32 %v792, 0.0
    %v859 = vmax.f32 %v795, 0.0
    %v860 = vmax.f32 %v797, 0.0
    %v861 = vmax.f32 %v800, 0.0
    %v862 = vmax.f32 %v802, 0.0
    %v863 = vmax.f32 %v805, 0.0
    %v864 = vmax.f32 %v807, 0.0
    %v865 = vmax.f32 %v810, 0.0
    %v866 = vmax.f32 %v812, 0.0
    %v867 = vmax.f32 %v815, 0.0
    %v868 = vmax.f32 %v817, 0.0
    %v869 = vmax.f32 %v820, 0.0
    %v870 = vmax.f32 %v822, 0.0
    %v871 = vmax.f32 %v825, 0.0
    %v872 = vmax.f32 %v827, 0.0
    %v873 = vmax.f32 %v830, 0.0
    %v874 = vmax.f32 %v832, 0.0
    %v875 = vmax.f32 %v835, 0.0
    %v876 = vmax.f32 %v837, 0.0
    %v877 = vmax.f32 %v840, 0.0
    %v878 = vmax.f32 %v842, 0.0
    %v879 = vmax.f32 %v845, 0.0
    %v880 = vmax.f32 %v847, 0.0
    %v881 = vpack.c.bf16 %v850, %v849
    %v882 = vpack.c.bf16 %v852, %v851
    %v883 = vpack.c.bf16 %v854, %v853
    %v884 = vpack.c.bf16 %v856, %v855
    %v885 = vpack.c.bf16 %v858, %v857
    %v886 = vpack.c.bf16 %v860, %v859
    %v887 = vpack.c.bf16 %v862, %v861
    %v888 = vpack.c.bf16 %v864, %v863
    %v889 = vpack.c.bf16 %v866, %v865
    %v890 = vpack.c.bf16 %v868, %v867
    %v891 = vpack.c.bf16 %v870, %v869
    %v892 = vpack.c.bf16 %v872, %v871
    %v893 = vpack.c.bf16 %v874, %v873
    %v894 = vpack.c.bf16 %v876, %v875
    %v895 = vpack.c.bf16 %v878, %v877
    %v896 = vpack.c.bf16 %v880, %v879
    %v897 = vld [vmem:[#allocation8] sm:$0xf]
    %v898 = vld [vmem:[#allocation8 + $0x4] sm:$0xf]
    %v899 = vld [vmem:[#allocation8 + $0x8] sm:$0xf]
    %v900 = vld [vmem:[#allocation8 + $0xc] sm:$0xf]
    %v901 = vld [vmem:[#allocation8 + $0x10] sm:$0xf]
    %v902 = vld [vmem:[#allocation8 + $0x14] sm:$0xf]
    %v903 = vld [vmem:[#allocation8 + $0x18] sm:$0xf]
    %v904 = vld [vmem:[#allocation8 + $0x1c] sm:$0xf]
    %v905 = vld [vmem:[#allocation8 + $0x20] sm:$0xf]
    %v906 = vld [vmem:[#allocation8 + $0x24] sm:$0xf]
    %v907 = vld [vmem:[#allocation8 + $0x28] sm:$0xf]
    %v908 = vld [vmem:[#allocation8 + $0x2c] sm:$0xf]
    %v909 = vld [vmem:[#allocation8 + $0x30] sm:$0xf]
    %v910 = vld [vmem:[#allocation8 + $0x34] sm:$0xf]
    %v911 = vld [vmem:[#allocation8 + $0x38] sm:$0xf]
    %v912 = vld [vmem:[#allocation8 + $0x3c] sm:$0xf]
    %v929 = vunpack.c.l.b16 %v897
    %v930 = vunpack.c.l.b16 %v898
    %v931 = vunpack.c.l.b16 %v899
    %v932 = vunpack.c.l.b16 %v900
    %v933 = vunpack.c.l.b16 %v901
    %v934 = vunpack.c.l.b16 %v902
    %v935 = vunpack.c.l.b16 %v903
    %v936 = vunpack.c.l.b16 %v904
    %v937 = vunpack.c.l.b16 %v905
    %v938 = vunpack.c.l.b16 %v906
    %v939 = vunpack.c.l.b16 %v907
    %v940 = vunpack.c.l.b16 %v908
    %v941 = vunpack.c.l.b16 %v909
    %v942 = vunpack.c.l.b16 %v910
    %v943 = vunpack.c.l.b16 %v911
    %v944 = vunpack.c.l.b16 %v912
    %v945 = vpack.c.b16 %v930, %v929
    %v946 = vpack.c.b16 %v932, %v931
    %v947 = vpack.c.b16 %v934, %v933
    %v948 = vpack.c.b16 %v936, %v935
    %v949 = vpack.c.b16 %v938, %v937
    %v950 = vpack.c.b16 %v940, %v939
    %v951 = vpack.c.b16 %v942, %v941
    %v952 = vpack.c.b16 %v944, %v943
    %961 = vmatpush.bf16.msra.mxu0 %v952
    %962 = vmatpush.bf16.msra.mxu0 %v951
    %963 = vmatpush.bf16.msra.mxu0 %v950
    %964 = vmatpush.bf16.msra.mxu0 %v949
    %965 = vmatpush.bf16.msra.mxu0 %v948
    %966 = vmatpush.bf16.msra.mxu0 %v947
    %967 = vmatpush.bf16.msra.mxu0 %v946
    %968 = vmatpush.bf16.msra.mxu0 %v945
    %969 = vmatmul.bf16.gmra.mxu0 %v881
    %v970 = vpop.f32.mrf.mxu0
    %v971 = vadd.f32 0.0, %v970
    %v972 = vpop.f32.mrf.mxu0
    %v973 = vadd.f32 0.0, %v972
    %974 = vmatmul.bf16.gmra.mxu0 %v882
    %v975 = vpop.f32.mrf.mxu0
    %v976 = vadd.f32 0.0, %v975
    %v977 = vpop.f32.mrf.mxu0
    %v978 = vadd.f32 0.0, %v977
    %979 = vmatmul.bf16.gmra.mxu0 %v883
    %v980 = vpop.f32.mrf.mxu0
    %v981 = vadd.f32 0.0, %v980
    %v982 = vpop.f32.mrf.mxu0
    %v983 = vadd.f32 0.0, %v982
    %984 = vmatmul.bf16.gmra.mxu0 %v884
    %v985 = vpop.f32.mrf.mxu0
    %v986 = vadd.f32 0.0, %v985
    %v987 = vpop.f32.mrf.mxu0
    %v988 = vadd.f32 0.0, %v987
    %989 = vmatmul.bf16.gmra.mxu0 %v885
    %v990 = vpop.f32.mrf.mxu0
    %v991 = vadd.f32 0.0, %v990
    %v992 = vpop.f32.mrf.mxu0
    %v993 = vadd.f32 0.0, %v992
    %994 = vmatmul.bf16.gmra.mxu0 %v886
    %v995 = vpop.f32.mrf.mxu0
    %v996 = vadd.f32 0.0, %v995
    %v997 = vpop.f32.mrf.mxu0
    %v998 = vadd.f32 0.0, %v997
    %999 = vmatmul.bf16.gmra.mxu0 %v887
    %v1000 = vpop.f32.mrf.mxu0
    %v1001 = vadd.f32 0.0, %v1000
    %v1002 = vpop.f32.mrf.mxu0
    %v1003 = vadd.f32 0.0, %v1002
    %1004 = vmatmul.bf16.gmra.mxu0 %v888
    %v1005 = vpop.f32.mrf.mxu0
    %v1006 = vadd.f32 0.0, %v1005
    %v1007 = vpop.f32.mrf.mxu0
    %v1008 = vadd.f32 0.0, %v1007
    %1009 = vmatmul.bf16.gmra.mxu0 %v889
    %v1010 = vpop.f32.mrf.mxu0
    %v1011 = vadd.f32 0.0, %v1010
    %v1012 = vpop.f32.mrf.mxu0
    %v1013 = vadd.f32 0.0, %v1012
    %1014 = vmatmul.bf16.gmra.mxu0 %v890
    %v1015 = vpop.f32.mrf.mxu0
    %v1016 = vadd.f32 0.0, %v1015
    %v1017 = vpop.f32.mrf.mxu0
    %v1018 = vadd.f32 0.0, %v1017
    %1019 = vmatmul.bf16.gmra.mxu0 %v891
    %v1020 = vpop.f32.mrf.mxu0
    %v1021 = vadd.f32 0.0, %v1020
    %v1022 = vpop.f32.mrf.mxu0
    %v1023 = vadd.f32 0.0, %v1022
    %1024 = vmatmul.bf16.gmra.mxu0 %v892
    %v1025 = vpop.f32.mrf.mxu0
    %v1026 = vadd.f32 0.0, %v1025
    %v1027 = vpop.f32.mrf.mxu0
    %v1028 = vadd.f32 0.0, %v1027
    %1029 = vmatmul.bf16.gmra.mxu0 %v893
    %v1030 = vpop.f32.mrf.mxu0
    %v1031 = vadd.f32 0.0, %v1030
    %v1032 = vpop.f32.mrf.mxu0
    %v1033 = vadd.f32 0.0, %v1032
    %1034 = vmatmul.bf16.gmra.mxu0 %v894
    %v1035 = vpop.f32.mrf.mxu0
    %v1036 = vadd.f32 0.0, %v1035
    %v1037 = vpop.f32.mrf.mxu0
    %v1038 = vadd.f32 0.0, %v1037
    %1039 = vmatmul.bf16.gmra.mxu0 %v895
    %v1040 = vpop.f32.mrf.mxu0
    %v1041 = vadd.f32 0.0, %v1040
    %v1042 = vpop.f32.mrf.mxu0
    %v1043 = vadd.f32 0.0, %v1042
    %1044 = vmatmul.bf16.gmra.mxu0 %v896
    %v1045 = vpop.f32.mrf.mxu0
    %v1046 = vadd.f32 0.0, %v1045
    %v1047 = vpop.f32.mrf.mxu0
    %v1048 = vadd.f32 0.0, %v1047
    %1049 = vdwg.mxu0
    %v1050 = vpack.c.bf16 %v973, %v971
    %v1051 = vpack.c.bf16 %v978, %v976
    %v1052 = vpack.c.bf16 %v983, %v981
    %v1053 = vpack.c.bf16 %v988, %v986
    %v1054 = vpack.c.bf16 %v993, %v991
    %v1055 = vpack.c.bf16 %v998, %v996
    %v1056 = vpack.c.bf16 %v1003, %v1001
    %v1057 = vpack.c.bf16 %v1008, %v1006
    %v1058 = vpack.c.bf16 %v1013, %v1011
    %v1059 = vpack.c.bf16 %v1018, %v1016
    %v1060 = vpack.c.bf16 %v1023, %v1021
    %v1061 = vpack.c.bf16 %v1028, %v1026
    %v1062 = vpack.c.bf16 %v1033, %v1031
    %v1063 = vpack.c.bf16 %v1038, %v1036
    %v1064 = vpack.c.bf16 %v1043, %v1041
    %v1065 = vpack.c.bf16 %v1048, %v1046
    %v1066 = vld [vmem:[%s5] sm:$0x1]
    %v1068 = vperm.slane %v1066, 0
    %1070 = vmatpush.bf16.msra.mxu0 %v1057
    %1071 = vmatpush.bf16.msra.mxu0 %v1056
    %1072 = vmatpush.bf16.msra.mxu0 %v1055
    %1073 = vmatpush.bf16.msra.mxu0 %v1054
    %1074 = vmatpush.bf16.msra.mxu0 %v1053
    %1075 = vmatpush.bf16.msra.mxu0 %v1052
    %1076 = vmatpush.bf16.msra.mxu0 %v1051
    %1077 = vmatpush.bf16.msra.mxu0 %v1050
    %1078 = vmatmul.bf16.gmra.mxu0 %v607
    %v1079 = vpop.f32.mrf.mxu0
    %v1080 = vadd.f32 %v1068, %v1079
    %v1081 = vpop.f32.mrf.mxu0
    %v1082 = vadd.f32 %v1068, %v1081
    %1083 = vmatmul.bf16.gmra.mxu0 %v609
    %v1084 = vpop.f32.mrf.mxu0
    %v1085 = vadd.f32 %v1068, %v1084
    %v1086 = vpop.f32.mrf.mxu0
    %v1087 = vadd.f32 %v1068, %v1086
    %1088 = vmatmul.bf16.gmra.mxu0 %v611
    %v1089 = vpop.f32.mrf.mxu0
    %v1090 = vadd.f32 %v1068, %v1089
    %v1091 = vpop.f32.mrf.mxu0
    %v1092 = vadd.f32 %v1068, %v1091
    %1093 = vmatmul.bf16.gmra.mxu0 %v613
    %v1094 = vpop.f32.mrf.mxu0
    %v1095 = vadd.f32 %v1068, %v1094
    %v1096 = vpop.f32.mrf.mxu0
    %v1097 = vadd.f32 %v1068, %v1096
    %1098 = vmatmul.bf16.gmra.mxu0 %v615
    %v1099 = vpop.f32.mrf.mxu0
    %v1100 = vadd.f32 %v1068, %v1099
    %v1101 = vpop.f32.mrf.mxu0
    %v1102 = vadd.f32 %v1068, %v1101
    %1103 = vmatmul.bf16.gmra.mxu0 %v617
    %v1104 = vpop.f32.mrf.mxu0
    %v1105 = vadd.f32 %v1068, %v1104
    %v1106 = vpop.f32.mrf.mxu0
    %v1107 = vadd.f32 %v1068, %v1106
    %1108 = vmatmul.bf16.gmra.mxu0 %v619
    %v1109 = vpop.f32.mrf.mxu0
    %v1110 = vadd.f32 %v1068, %v1109
    %v1111 = vpop.f32.mrf.mxu0
    %v1112 = vadd.f32 %v1068, %v1111
    %1113 = vmatmul.bf16.gmra.mxu0 %v621
    %v1114 = vpop.f32.mrf.mxu0
    %v1115 = vadd.f32 %v1068, %v1114
    %v1116 = vpop.f32.mrf.mxu0
    %v1117 = vadd.f32 %v1068, %v1116
    %1118 = vmatmul.bf16.gmra.mxu0 %v623
    %v1119 = vpop.f32.mrf.mxu0
    %v1120 = vadd.f32 %v1068, %v1119
    %v1121 = vpop.f32.mrf.mxu0
    %v1122 = vadd.f32 %v1068, %v1121
    %1123 = vmatmul.bf16.gmra.mxu0 %v625
    %v1124 = vpop.f32.mrf.mxu0
    %v1125 = vadd.f32 %v1068, %v1124
    %v1126 = vpop.f32.mrf.mxu0
    %v1127 = vadd.f32 %v1068, %v1126
    %1128 = vmatmul.bf16.gmra.mxu0 %v627
    %v1129 = vpop.f32.mrf.mxu0
    %v1130 = vadd.f32 %v1068, %v1129
    %v1131 = vpop.f32.mrf.mxu0
    %v1132 = vadd.f32 %v1068, %v1131
    %1133 = vmatmul.bf16.gmra.mxu0 %v629
    %v1134 = vpop.f32.mrf.mxu0
    %v1135 = vadd.f32 %v1068, %v1134
    %v1136 = vpop.f32.mrf.mxu0
    %v1137 = vadd.f32 %v1068, %v1136
    %1138 = vmatmul.bf16.gmra.mxu0 %v631
    %v1139 = vpop.f32.mrf.mxu0
    %v1140 = vadd.f32 %v1068, %v1139
    %v1141 = vpop.f32.mrf.mxu0
    %v1142 = vadd.f32 %v1068, %v1141
    %1143 = vmatmul.bf16.gmra.mxu0 %v633
    %v1144 = vpop.f32.mrf.mxu0
    %v1145 = vadd.f32 %v1068, %v1144
    %v1146 = vpop.f32.mrf.mxu0
    %v1147 = vadd.f32 %v1068, %v1146
    %1148 = vmatmul.bf16.gmra.mxu0 %v635
    %v1149 = vpop.f32.mrf.mxu0
    %v1150 = vadd.f32 %v1068, %v1149
    %v1151 = vpop.f32.mrf.mxu0
    %v1152 = vadd.f32 %v1068, %v1151
    %1153 = vmatmul.bf16.gmra.mxu0 %v637
    %v1154 = vpop.f32.mrf.mxu0
    %v1155 = vadd.f32 %v1068, %v1154
    %v1156 = vpop.f32.mrf.mxu0
    %v1157 = vadd.f32 %v1068, %v1156
    %1158 = vdwg.mxu0
    %1159 = vmatpush.bf16.msra.mxu0 %v1065
    %1160 = vmatpush.bf16.msra.mxu0 %v1064
    %1161 = vmatpush.bf16.msra.mxu0 %v1063
    %1162 = vmatpush.bf16.msra.mxu0 %v1062
    %1163 = vmatpush.bf16.msra.mxu0 %v1061
    %1164 = vmatpush.bf16.msra.mxu0 %v1060
    %1165 = vmatpush.bf16.msra.mxu0 %v1059
    %1166 = vmatpush.bf16.msra.mxu0 %v1058
    %1167 = vmatmul.bf16.gmra.mxu0 %v608
    %v1168 = vpop.f32.mrf.mxu0
    %v1169 = vadd.f32 %v1080, %v1168
    %v1170 = vpop.f32.mrf.mxu0
    %v1171 = vadd.f32 %v1082, %v1170
    %1172 = vmatmul.bf16.gmra.mxu0 %v610
    %v1173 = vpop.f32.mrf.mxu0
    %v1174 = vadd.f32 %v1085, %v1173
    %v1175 = vpop.f32.mrf.mxu0
    %v1176 = vadd.f32 %v1087, %v1175
    %1177 = vmatmul.bf16.gmra.mxu0 %v612
    %v1178 = vpop.f32.mrf.mxu0
    %v1179 = vadd.f32 %v1090, %v1178
    %v1180 = vpop.f32.mrf.mxu0
    %v1181 = vadd.f32 %v1092, %v1180
    %1182 = vmatmul.bf16.gmra.mxu0 %v614
    %v1183 = vpop.f32.mrf.mxu0
    %v1184 = vadd.f32 %v1095, %v1183
    %v1185 = vpop.f32.mrf.mxu0
    %v1186 = vadd.f32 %v1097, %v1185
    %1187 = vmatmul.bf16.gmra.mxu0 %v616
    %v1188 = vpop.f32.mrf.mxu0
    %v1189 = vadd.f32 %v1100, %v1188
    %v1190 = vpop.f32.mrf.mxu0
    %v1191 = vadd.f32 %v1102, %v1190
    %1192 = vmatmul.bf16.gmra.mxu0 %v618
    %v1193 = vpop.f32.mrf.mxu0
    %v1194 = vadd.f32 %v1105, %v1193
    %v1195 = vpop.f32.mrf.mxu0
    %v1196 = vadd.f32 %v1107, %v1195
    %1197 = vmatmul.bf16.gmra.mxu0 %v620
    %v1198 = vpop.f32.mrf.mxu0
    %v1199 = vadd.f32 %v1110, %v1198
    %v1200 = vpop.f32.mrf.mxu0
    %v1201 = vadd.f32 %v1112, %v1200
    %1202 = vmatmul.bf16.gmra.mxu0 %v622
    %v1203 = vpop.f32.mrf.mxu0
    %v1204 = vadd.f32 %v1115, %v1203
    %v1205 = vpop.f32.mrf.mxu0
    %v1206 = vadd.f32 %v1117, %v1205
    %1207 = vmatmul.bf16.gmra.mxu0 %v624
    %v1208 = vpop.f32.mrf.mxu0
    %v1209 = vadd.f32 %v1120, %v1208
    %v1210 = vpop.f32.mrf.mxu0
    %v1211 = vadd.f32 %v1122, %v1210
    %1212 = vmatmul.bf16.gmra.mxu0 %v626
    %v1213 = vpop.f32.mrf.mxu0
    %v1214 = vadd.f32 %v1125, %v1213
    %v1215 = vpop.f32.mrf.mxu0
    %v1216 = vadd.f32 %v1127, %v1215
    %1217 = vmatmul.bf16.gmra.mxu0 %v628
    %v1218 = vpop.f32.mrf.mxu0
    %v1219 = vadd.f32 %v1130, %v1218
    %v1220 = vpop.f32.mrf.mxu0
    %v1221 = vadd.f32 %v1132, %v1220
    %1222 = vmatmul.bf16.gmra.mxu0 %v630
    %v1223 = vpop.f32.mrf.mxu0
    %v1224 = vadd.f32 %v1135, %v1223
    %v1225 = vpop.f32.mrf.mxu0
    %v1226 = vadd.f32 %v1137, %v1225
    %1227 = vmatmul.bf16.gmra.mxu0 %v632
    %v1228 = vpop.f32.mrf.mxu0
    %v1229 = vadd.f32 %v1140, %v1228
    %v1230 = vpop.f32.mrf.mxu0
    %v1231 = vadd.f32 %v1142, %v1230
    %1232 = vmatmul.bf16.gmra.mxu0 %v634
    %v1233 = vpop.f32.mrf.mxu0
    %v1234 = vadd.f32 %v1145, %v1233
    %v1235 = vpop.f32.mrf.mxu0
    %v1236 = vadd.f32 %v1147, %v1235
    %1237 = vmatmul.bf16.gmra.mxu0 %v636
    %v1238 = vpop.f32.mrf.mxu0
    %v1239 = vadd.f32 %v1150, %v1238
    %v1240 = vpop.f32.mrf.mxu0
    %v1241 = vadd.f32 %v1152, %v1240
    %1242 = vmatmul.bf16.gmra.mxu0 %v638
    %v1243 = vpop.f32.mrf.mxu0
    %v1244 = vadd.f32 %v1155, %v1243
    %v1245 = vpop.f32.mrf.mxu0
    %v1246 = vadd.f32 %v1157, %v1245
    %1247 = vdwg.mxu0
    %v1248 = vmax.f32 %v1169, 0.0
    %v1249 = vmax.f32 %v1171, 0.0
    %v1250 = vmax.f32 %v1174, 0.0
    %v1251 = vmax.f32 %v1176, 0.0
    %v1252 = vmax.f32 %v1179, 0.0
    %v1253 = vmax.f32 %v1181, 0.0
    %v1254 = vmax.f32 %v1184, 0.0
    %v1255 = vmax.f32 %v1186, 0.0
    %v1256 = vmax.f32 %v1189, 0.0
    %v1257 = vmax.f32 %v1191, 0.0
    %v1258 = vmax.f32 %v1194, 0.0
    %v1259 = vmax.f32 %v1196, 0.0
    %v1260 = vmax.f32 %v1199, 0.0
    %v1261 = vmax.f32 %v1201, 0.0
    %v1262 = vmax.f32 %v1204, 0.0
    %v1263 = vmax.f32 %v1206, 0.0
    %v1264 = vmax.f32 %v1209, 0.0
    %v1265 = vmax.f32 %v1211, 0.0
    %v1266 = vmax.f32 %v1214, 0.0
    %v1267 = vmax.f32 %v1216, 0.0
    %v1268 = vmax.f32 %v1219, 0.0
    %v1269 = vmax.f32 %v1221, 0.0
    %v1270 = vmax.f32 %v1224, 0.0
    %v1271 = vmax.f32 %v1226, 0.0
    %v1272 = vmax.f32 %v1229, 0.0
    %v1273 = vmax.f32 %v1231, 0.0
    %v1274 = vmax.f32 %v1234, 0.0
    %v1275 = vmax.f32 %v1236, 0.0
    %v1276 = vmax.f32 %v1239, 0.0
    %v1277 = vmax.f32 %v1241, 0.0
    %v1278 = vmax.f32 %v1244, 0.0
    %v1279 = vmax.f32 %v1246, 0.0
    %v1280 = vpack.c.bf16 %v1249, %v1248
    %v1281 = vpack.c.bf16 %v1251, %v1250
    %v1282 = vpack.c.bf16 %v1253, %v1252
    %v1283 = vpack.c.bf16 %v1255, %v1254
    %v1284 = vpack.c.bf16 %v1257, %v1256
    %v1285 = vpack.c.bf16 %v1259, %v1258
    %v1286 = vpack.c.bf16 %v1261, %v1260
    %v1287 = vpack.c.bf16 %v1263, %v1262
    %v1288 = vpack.c.bf16 %v1265, %v1264
    %v1289 = vpack.c.bf16 %v1267, %v1266
    %v1290 = vpack.c.bf16 %v1269, %v1268
    %v1291 = vpack.c.bf16 %v1271, %v1270
    %v1292 = vpack.c.bf16 %v1273, %v1272
    %v1293 = vpack.c.bf16 %v1275, %v1274
    %v1294 = vpack.c.bf16 %v1277, %v1276
    %v1295 = vpack.c.bf16 %v1279, %v1278
    %v1296 = vld [vmem:[#allocation10] sm:$0xf]
    %v1297 = vld [vmem:[#allocation10 + $0x4] sm:$0xf]
    %v1298 = vld [vmem:[#allocation10 + $0x8] sm:$0xf]
    %v1299 = vld [vmem:[#allocation10 + $0xc] sm:$0xf]
    %v1300 = vld [vmem:[#allocation10 + $0x10] sm:$0xf]
    %v1301 = vld [vmem:[#allocation10 + $0x14] sm:$0xf]
    %v1302 = vld [vmem:[#allocation10 + $0x18] sm:$0xf]
    %v1303 = vld [vmem:[#allocation10 + $0x1c] sm:$0xf]
    %v1304 = vld [vmem:[#allocation10 + $0x20] sm:$0xf]
    %v1305 = vld [vmem:[#allocation10 + $0x24] sm:$0xf]
    %v1306 = vld [vmem:[#allocation10 + $0x28] sm:$0xf]
    %v1307 = vld [vmem:[#allocation10 + $0x2c] sm:$0xf]
    %v1308 = vld [vmem:[#allocation10 + $0x30] sm:$0xf]
    %v1309 = vld [vmem:[#allocation10 + $0x34] sm:$0xf]
    %v1310 = vld [vmem:[#allocation10 + $0x38] sm:$0xf]
    %v1311 = vld [vmem:[#allocation10 + $0x3c] sm:$0xf]
    %v1328 = vunpack.c.l.b16 %v1296
    %v1329 = vunpack.c.l.b16 %v1297
    %v1330 = vunpack.c.l.b16 %v1298
    %v1331 = vunpack.c.l.b16 %v1299
    %v1332 = vunpack.c.l.b16 %v1300
    %v1333 = vunpack.c.l.b16 %v1301
    %v1334 = vunpack.c.l.b16 %v1302
    %v1335 = vunpack.c.l.b16 %v1303
    %v1336 = vunpack.c.l.b16 %v1304
    %v1337 = vunpack.c.l.b16 %v1305
    %v1338 = vunpack.c.l.b16 %v1306
    %v1339 = vunpack.c.l.b16 %v1307
    %v1340 = vunpack.c.l.b16 %v1308
    %v1341 = vunpack.c.l.b16 %v1309
    %v1342 = vunpack.c.l.b16 %v1310
    %v1343 = vunpack.c.l.b16 %v1311
    %v1344 = vpack.c.b16 %v1329, %v1328
    %v1345 = vpack.c.b16 %v1331, %v1330
    %v1346 = vpack.c.b16 %v1333, %v1332
    %v1347 = vpack.c.b16 %v1335, %v1334
    %v1348 = vpack.c.b16 %v1337, %v1336
    %v1349 = vpack.c.b16 %v1339, %v1338
    %v1350 = vpack.c.b16 %v1341, %v1340
    %v1351 = vpack.c.b16 %v1343, %v1342
    %1360 = vmatpush.bf16.msra.mxu0 %v1351
    %1361 = vmatpush.bf16.msra.mxu0 %v1350
    %1362 = vmatpush.bf16.msra.mxu0 %v1349
    %1363 = vmatpush.bf16.msra.mxu0 %v1348
    %1364 = vmatpush.bf16.msra.mxu0 %v1347
    %1365 = vmatpush.bf16.msra.mxu0 %v1346
    %1366 = vmatpush.bf16.msra.mxu0 %v1345
    %1367 = vmatpush.bf16.msra.mxu0 %v1344
    %1368 = vmatmul.bf16.gmra.mxu0 %v1280
    %v1369 = vpop.f32.mrf.mxu0
    %v1370 = vadd.f32 0.0, %v1369
    %v1371 = vpop.f32.mrf.mxu0
    %v1372 = vadd.f32 0.0, %v1371
    %1373 = vmatmul.bf16.gmra.mxu0 %v1281
    %v1374 = vpop.f32.mrf.mxu0
    %v1375 = vadd.f32 0.0, %v1374
    %v1376 = vpop.f32.mrf.mxu0
    %v1377 = vadd.f32 0.0, %v1376
    %1378 = vmatmul.bf16.gmra.mxu0 %v1282
    %v1379 = vpop.f32.mrf.mxu0
    %v1380 = vadd.f32 0.0, %v1379
    %v1381 = vpop.f32.mrf.mxu0
    %v1382 = vadd.f32 0.0, %v1381
    %1383 = vmatmul.bf16.gmra.mxu0 %v1283
    %v1384 = vpop.f32.mrf.mxu0
    %v1385 = vadd.f32 0.0, %v1384
    %v1386 = vpop.f32.mrf.mxu0
    %v1387 = vadd.f32 0.0, %v1386
    %1388 = vmatmul.bf16.gmra.mxu0 %v1284
    %v1389 = vpop.f32.mrf.mxu0
    %v1390 = vadd.f32 0.0, %v1389
    %v1391 = vpop.f32.mrf.mxu0
    %v1392 = vadd.f32 0.0, %v1391
    %1393 = vmatmul.bf16.gmra.mxu0 %v1285
    %v1394 = vpop.f32.mrf.mxu0
    %v1395 = vadd.f32 0.0, %v1394
    %v1396 = vpop.f32.mrf.mxu0
    %v1397 = vadd.f32 0.0, %v1396
    %1398 = vmatmul.bf16.gmra.mxu0 %v1286
    %v1399 = vpop.f32.mrf.mxu0
    %v1400 = vadd.f32 0.0, %v1399
    %v1401 = vpop.f32.mrf.mxu0
    %v1402 = vadd.f32 0.0, %v1401
    %1403 = vmatmul.bf16.gmra.mxu0 %v1287
    %v1404 = vpop.f32.mrf.mxu0
    %v1405 = vadd.f32 0.0, %v1404
    %v1406 = vpop.f32.mrf.mxu0
    %v1407 = vadd.f32 0.0, %v1406
    %1408 = vmatmul.bf16.gmra.mxu0 %v1288
    %v1409 = vpop.f32.mrf.mxu0
    %v1410 = vadd.f32 0.0, %v1409
    %v1411 = vpop.f32.mrf.mxu0
    %v1412 = vadd.f32 0.0, %v1411
    %1413 = vmatmul.bf16.gmra.mxu0 %v1289
    %v1414 = vpop.f32.mrf.mxu0
    %v1415 = vadd.f32 0.0, %v1414
    %v1416 = vpop.f32.mrf.mxu0
    %v1417 = vadd.f32 0.0, %v1416
    %1418 = vmatmul.bf16.gmra.mxu0 %v1290
    %v1419 = vpop.f32.mrf.mxu0
    %v1420 = vadd.f32 0.0, %v1419
    %v1421 = vpop.f32.mrf.mxu0
    %v1422 = vadd.f32 0.0, %v1421
    %1423 = vmatmul.bf16.gmra.mxu0 %v1291
    %v1424 = vpop.f32.mrf.mxu0
    %v1425 = vadd.f32 0.0, %v1424
    %v1426 = vpop.f32.mrf.mxu0
    %v1427 = vadd.f32 0.0, %v1426
    %1428 = vmatmul.bf16.gmra.mxu0 %v1292
    %v1429 = vpop.f32.mrf.mxu0
    %v1430 = vadd.f32 0.0, %v1429
    %v1431 = vpop.f32.mrf.mxu0
    %v1432 = vadd.f32 0.0, %v1431
    %1433 = vmatmul.bf16.gmra.mxu0 %v1293
    %v1434 = vpop.f32.mrf.mxu0
    %v1435 = vadd.f32 0.0, %v1434
    %v1436 = vpop.f32.mrf.mxu0
    %v1437 = vadd.f32 0.0, %v1436
    %1438 = vmatmul.bf16.gmra.mxu0 %v1294
    %v1439 = vpop.f32.mrf.mxu0
    %v1440 = vadd.f32 0.0, %v1439
    %v1441 = vpop.f32.mrf.mxu0
    %v1442 = vadd.f32 0.0, %v1441
    %1443 = vmatmul.bf16.gmra.mxu0 %v1295
    %v1444 = vpop.f32.mrf.mxu0
    %v1445 = vadd.f32 0.0, %v1444
    %v1446 = vpop.f32.mrf.mxu0
    %v1447 = vadd.f32 0.0, %v1446
    %1448 = vdwg.mxu0
    %v1449 = vpack.c.bf16 %v1372, %v1370
    %v1450 = vpack.c.bf16 %v1377, %v1375
    %v1451 = vpack.c.bf16 %v1382, %v1380
    %v1452 = vpack.c.bf16 %v1387, %v1385
    %v1453 = vpack.c.bf16 %v1392, %v1390
    %v1454 = vpack.c.bf16 %v1397, %v1395
    %v1455 = vpack.c.bf16 %v1402, %v1400
    %v1456 = vpack.c.bf16 %v1407, %v1405
    %v1457 = vpack.c.bf16 %v1412, %v1410
    %v1458 = vpack.c.bf16 %v1417, %v1415
    %v1459 = vpack.c.bf16 %v1422, %v1420
    %v1460 = vpack.c.bf16 %v1427, %v1425
    %v1461 = vpack.c.bf16 %v1432, %v1430
    %v1462 = vpack.c.bf16 %v1437, %v1435
    %v1463 = vpack.c.bf16 %v1442, %v1440
    %v1464 = vpack.c.bf16 %v1447, %v1445
    %v1465 = vld [vmem:[%s7] sm:$0x1]
    %v1467 = vperm.slane %v1465, 0
    %1469 = vmatpush.bf16.msra.mxu0 %v1456
    %1470 = vmatpush.bf16.msra.mxu0 %v1455
    %1471 = vmatpush.bf16.msra.mxu0 %v1454
    %1472 = vmatpush.bf16.msra.mxu0 %v1453
    %1473 = vmatpush.bf16.msra.mxu0 %v1452
    %1474 = vmatpush.bf16.msra.mxu0 %v1451
    %1475 = vmatpush.bf16.msra.mxu0 %v1450
    %1476 = vmatpush.bf16.msra.mxu0 %v1449
    %1477 = vmatmul.bf16.gmra.mxu0 %v607
    %v1478 = vpop.f32.mrf.mxu0
    %v1479 = vadd.f32 %v1467, %v1478
    %v1480 = vpop.f32.mrf.mxu0
    %v1481 = vadd.f32 %v1467, %v1480
    %1482 = vmatmul.bf16.gmra.mxu0 %v609
    %v1483 = vpop.f32.mrf.mxu0
    %v1484 = vadd.f32 %v1467, %v1483
    %v1485 = vpop.f32.mrf.mxu0
    %v1486 = vadd.f32 %v1467, %v1485
    %1487 = vmatmul.bf16.gmra.mxu0 %v611
    %v1488 = vpop.f32.mrf.mxu0
    %v1489 = vadd.f32 %v1467, %v1488
    %v1490 = vpop.f32.mrf.mxu0
    %v1491 = vadd.f32 %v1467, %v1490
    %1492 = vmatmul.bf16.gmra.mxu0 %v613
    %v1493 = vpop.f32.mrf.mxu0
    %v1494 = vadd.f32 %v1467, %v1493
    %v1495 = vpop.f32.mrf.mxu0
    %v1496 = vadd.f32 %v1467, %v1495
    %1497 = vmatmul.bf16.gmra.mxu0 %v615
    %v1498 = vpop.f32.mrf.mxu0
    %v1499 = vadd.f32 %v1467, %v1498
    %v1500 = vpop.f32.mrf.mxu0
    %v1501 = vadd.f32 %v1467, %v1500
    %1502 = vmatmul.bf16.gmra.mxu0 %v617
    %v1503 = vpop.f32.mrf.mxu0
    %v1504 = vadd.f32 %v1467, %v1503
    %v1505 = vpop.f32.mrf.mxu0
    %v1506 = vadd.f32 %v1467, %v1505
    %1507 = vmatmul.bf16.gmra.mxu0 %v619
    %v1508 = vpop.f32.mrf.mxu0
    %v1509 = vadd.f32 %v1467, %v1508
    %v1510 = vpop.f32.mrf.mxu0
    %v1511 = vadd.f32 %v1467, %v1510
    %1512 = vmatmul.bf16.gmra.mxu0 %v621
    %v1513 = vpop.f32.mrf.mxu0
    %v1514 = vadd.f32 %v1467, %v1513
    %v1515 = vpop.f32.mrf.mxu0
    %v1516 = vadd.f32 %v1467, %v1515
    %1517 = vmatmul.bf16.gmra.mxu0 %v623
    %v1518 = vpop.f32.mrf.mxu0
    %v1519 = vadd.f32 %v1467, %v1518
    %v1520 = vpop.f32.mrf.mxu0
    %v1521 = vadd.f32 %v1467, %v1520
    %1522 = vmatmul.bf16.gmra.mxu0 %v625
    %v1523 = vpop.f32.mrf.mxu0
    %v1524 = vadd.f32 %v1467, %v1523
    %v1525 = vpop.f32.mrf.mxu0
    %v1526 = vadd.f32 %v1467, %v1525
    %1527 = vmatmul.bf16.gmra.mxu0 %v627
    %v1528 = vpop.f32.mrf.mxu0
    %v1529 = vadd.f32 %v1467, %v1528
    %v1530 = vpop.f32.mrf.mxu0
    %v1531 = vadd.f32 %v1467, %v1530
    %1532 = vmatmul.bf16.gmra.mxu0 %v629
    %v1533 = vpop.f32.mrf.mxu0
    %v1534 = vadd.f32 %v1467, %v1533
    %v1535 = vpop.f32.mrf.mxu0
    %v1536 = vadd.f32 %v1467, %v1535
    %1537 = vmatmul.bf16.gmra.mxu0 %v631
    %v1538 = vpop.f32.mrf.mxu0
    %v1539 = vadd.f32 %v1467, %v1538
    %v1540 = vpop.f32.mrf.mxu0
    %v1541 = vadd.f32 %v1467, %v1540
    %1542 = vmatmul.bf16.gmra.mxu0 %v633
    %v1543 = vpop.f32.mrf.mxu0
    %v1544 = vadd.f32 %v1467, %v1543
    %v1545 = vpop.f32.mrf.mxu0
    %v1546 = vadd.f32 %v1467, %v1545
    %1547 = vmatmul.bf16.gmra.mxu0 %v635
    %v1548 = vpop.f32.mrf.mxu0
    %v1549 = vadd.f32 %v1467, %v1548
    %v1550 = vpop.f32.mrf.mxu0
    %v1551 = vadd.f32 %v1467, %v1550
    %1552 = vmatmul.bf16.gmra.mxu0 %v637
    %v1553 = vpop.f32.mrf.mxu0
    %v1554 = vadd.f32 %v1467, %v1553
    %v1555 = vpop.f32.mrf.mxu0
    %v1556 = vadd.f32 %v1467, %v1555
    %1557 = vdwg.mxu0
    %1558 = vmatpush.bf16.msra.mxu0 %v1464
    %1559 = vmatpush.bf16.msra.mxu0 %v1463
    %1560 = vmatpush.bf16.msra.mxu0 %v1462
    %1561 = vmatpush.bf16.msra.mxu0 %v1461
    %1562 = vmatpush.bf16.msra.mxu0 %v1460
    %1563 = vmatpush.bf16.msra.mxu0 %v1459
    %1564 = vmatpush.bf16.msra.mxu0 %v1458
    %1565 = vmatpush.bf16.msra.mxu0 %v1457
    %1566 = vmatmul.bf16.gmra.mxu0 %v608
    %v1567 = vpop.f32.mrf.mxu0
    %v1568 = vadd.f32 %v1479, %v1567
    %v1569 = vpop.f32.mrf.mxu0
    %v1570 = vadd.f32 %v1481, %v1569
    %1571 = vmatmul.bf16.gmra.mxu0 %v610
    %v1572 = vpop.f32.mrf.mxu0
    %v1573 = vadd.f32 %v1484, %v1572
    %v1574 = vpop.f32.mrf.mxu0
    %v1575 = vadd.f32 %v1486, %v1574
    %1576 = vmatmul.bf16.gmra.mxu0 %v612
    %v1577 = vpop.f32.mrf.mxu0
    %v1578 = vadd.f32 %v1489, %v1577
    %v1579 = vpop.f32.mrf.mxu0
    %v1580 = vadd.f32 %v1491, %v1579
    %1581 = vmatmul.bf16.gmra.mxu0 %v614
    %v1582 = vpop.f32.mrf.mxu0
    %v1583 = vadd.f32 %v1494, %v1582
    %v1584 = vpop.f32.mrf.mxu0
    %v1585 = vadd.f32 %v1496, %v1584
    %1586 = vmatmul.bf16.gmra.mxu0 %v616
    %v1587 = vpop.f32.mrf.mxu0
    %v1588 = vadd.f32 %v1499, %v1587
    %v1589 = vpop.f32.mrf.mxu0
    %v1590 = vadd.f32 %v1501, %v1589
    %1591 = vmatmul.bf16.gmra.mxu0 %v618
    %v1592 = vpop.f32.mrf.mxu0
    %v1593 = vadd.f32 %v1504, %v1592
    %v1594 = vpop.f32.mrf.mxu0
    %v1595 = vadd.f32 %v1506, %v1594
    %1596 = vmatmul.bf16.gmra.mxu0 %v620
    %v1597 = vpop.f32.mrf.mxu0
    %v1598 = vadd.f32 %v1509, %v1597
    %v1599 = vpop.f32.mrf.mxu0
    %v1600 = vadd.f32 %v1511, %v1599
    %1601 = vmatmul.bf16.gmra.mxu0 %v622
    %v1602 = vpop.f32.mrf.mxu0
    %v1603 = vadd.f32 %v1514, %v1602
    %v1604 = vpop.f32.mrf.mxu0
    %v1605 = vadd.f32 %v1516, %v1604
    %1606 = vmatmul.bf16.gmra.mxu0 %v624
    %v1607 = vpop.f32.mrf.mxu0
    %v1608 = vadd.f32 %v1519, %v1607
    %v1609 = vpop.f32.mrf.mxu0
    %v1610 = vadd.f32 %v1521, %v1609
    %1611 = vmatmul.bf16.gmra.mxu0 %v626
    %v1612 = vpop.f32.mrf.mxu0
    %v1613 = vadd.f32 %v1524, %v1612
    %v1614 = vpop.f32.mrf.mxu0
    %v1615 = vadd.f32 %v1526, %v1614
    %1616 = vmatmul.bf16.gmra.mxu0 %v628
    %v1617 = vpop.f32.mrf.mxu0
    %v1618 = vadd.f32 %v1529, %v1617
    %v1619 = vpop.f32.mrf.mxu0
    %v1620 = vadd.f32 %v1531, %v1619
    %1621 = vmatmul.bf16.gmra.mxu0 %v630
    %v1622 = vpop.f32.mrf.mxu0
    %v1623 = vadd.f32 %v1534, %v1622
    %v1624 = vpop.f32.mrf.mxu0
    %v1625 = vadd.f32 %v1536, %v1624
    %1626 = vmatmul.bf16.gmra.mxu0 %v632
    %v1627 = vpop.f32.mrf.mxu0
    %v1628 = vadd.f32 %v1539, %v1627
    %v1629 = vpop.f32.mrf.mxu0
    %v1630 = vadd.f32 %v1541, %v1629
    %1631 = vmatmul.bf16.gmra.mxu0 %v634
    %v1632 = vpop.f32.mrf.mxu0
    %v1633 = vadd.f32 %v1544, %v1632
    %v1634 = vpop.f32.mrf.mxu0
    %v1635 = vadd.f32 %v1546, %v1634
    %1636 = vmatmul.bf16.gmra.mxu0 %v636
    %v1637 = vpop.f32.mrf.mxu0
    %v1638 = vadd.f32 %v1549, %v1637
    %v1639 = vpop.f32.mrf.mxu0
    %v1640 = vadd.f32 %v1551, %v1639
    %1641 = vmatmul.bf16.gmra.mxu0 %v638
    %v1642 = vpop.f32.mrf.mxu0
    %v1643 = vadd.f32 %v1554, %v1642
    %v1644 = vpop.f32.mrf.mxu0
    %v1645 = vadd.f32 %v1556, %v1644
    %1646 = vdwg.mxu0
    %v1647 = vmax.f32 %v1568, 0.0
    %v1648 = vmax.f32 %v1570, 0.0
    %v1649 = vmax.f32 %v1573, 0.0
    %v1650 = vmax.f32 %v1575, 0.0
    %v1651 = vmax.f32 %v1578, 0.0
    %v1652 = vmax.f32 %v1580, 0.0
    %v1653 = vmax.f32 %v1583, 0.0
    %v1654 = vmax.f32 %v1585, 0.0
    %v1655 = vmax.f32 %v1588, 0.0
    %v1656 = vmax.f32 %v1590, 0.0
    %v1657 = vmax.f32 %v1593, 0.0
    %v1658 = vmax.f32 %v1595, 0.0
    %v1659 = vmax.f32 %v1598, 0.0
    %v1660 = vmax.f32 %v1600, 0.0
    %v1661 = vmax.f32 %v1603, 0.0
    %v1662 = vmax.f32 %v1605, 0.0
    %v1663 = vmax.f32 %v1608, 0.0
    %v1664 = vmax.f32 %v1610, 0.0
    %v1665 = vmax.f32 %v1613, 0.0
    %v1666 = vmax.f32 %v1615, 0.0
    %v1667 = vmax.f32 %v1618, 0.0
    %v1668 = vmax.f32 %v1620, 0.0
    %v1669 = vmax.f32 %v1623, 0.0
    %v1670 = vmax.f32 %v1625, 0.0
    %v1671 = vmax.f32 %v1628, 0.0
    %v1672 = vmax.f32 %v1630, 0.0
    %v1673 = vmax.f32 %v1633, 0.0
    %v1674 = vmax.f32 %v1635, 0.0
    %v1675 = vmax.f32 %v1638, 0.0
    %v1676 = vmax.f32 %v1640, 0.0
    %v1677 = vmax.f32 %v1643, 0.0
    %v1678 = vmax.f32 %v1645, 0.0
    %v1679 = vpack.c.bf16 %v1648, %v1647
    %v1680 = vpack.c.bf16 %v1650, %v1649
    %v1681 = vpack.c.bf16 %v1652, %v1651
    %v1682 = vpack.c.bf16 %v1654, %v1653
    %v1683 = vpack.c.bf16 %v1656, %v1655
    %v1684 = vpack.c.bf16 %v1658, %v1657
    %v1685 = vpack.c.bf16 %v1660, %v1659
    %v1686 = vpack.c.bf16 %v1662, %v1661
    %v1687 = vpack.c.bf16 %v1664, %v1663
    %v1688 = vpack.c.bf16 %v1666, %v1665
    %v1689 = vpack.c.bf16 %v1668, %v1667
    %v1690 = vpack.c.bf16 %v1670, %v1669
    %v1691 = vpack.c.bf16 %v1672, %v1671
    %v1692 = vpack.c.bf16 %v1674, %v1673
    %v1693 = vpack.c.bf16 %v1676, %v1675
    %v1694 = vpack.c.bf16 %v1678, %v1677
    %v1695 = vld [vmem:[#allocation11] sm:$0xf]
    %v1696 = vld [vmem:[#allocation11 + $0x4] sm:$0xf]
    %v1697 = vld [vmem:[#allocation11 + $0x8] sm:$0xf]
    %v1698 = vld [vmem:[#allocation11 + $0xc] sm:$0xf]
    %v1699 = vld [vmem:[#allocation11 + $0x10] sm:$0xf]
    %v1700 = vld [vmem:[#allocation11 + $0x14] sm:$0xf]
    %v1701 = vld [vmem:[#allocation11 + $0x18] sm:$0xf]
    %v1702 = vld [vmem:[#allocation11 + $0x1c] sm:$0xf]
    %v1703 = vld [vmem:[#allocation11 + $0x20] sm:$0xf]
    %v1704 = vld [vmem:[#allocation11 + $0x24] sm:$0xf]
    %v1705 = vld [vmem:[#allocation11 + $0x28] sm:$0xf]
    %v1706 = vld [vmem:[#allocation11 + $0x2c] sm:$0xf]
    %v1707 = vld [vmem:[#allocation11 + $0x30] sm:$0xf]
    %v1708 = vld [vmem:[#allocation11 + $0x34] sm:$0xf]
    %v1709 = vld [vmem:[#allocation11 + $0x38] sm:$0xf]
    %v1710 = vld [vmem:[#allocation11 + $0x3c] sm:$0xf]
    %v1711 = vld [vmem:[#allocation13] sm:$0x1]
    %v1713 = vperm.slane %v1711, 0
    %v1731 = vunpack.c.l.b16 %v1695
    %v1732 = vunpack.c.l.b16 %v1696
    %v1733 = vunpack.c.l.b16 %v1697
    %v1734 = vunpack.c.l.b16 %v1698
    %v1735 = vunpack.c.l.b16 %v1699
    %v1736 = vunpack.c.l.b16 %v1700
    %v1737 = vunpack.c.l.b16 %v1701
    %v1738 = vunpack.c.l.b16 %v1702
    %v1739 = vunpack.c.l.b16 %v1703
    %v1740 = vunpack.c.l.b16 %v1704
    %v1741 = vunpack.c.l.b16 %v1705
    %v1742 = vunpack.c.l.b16 %v1706
    %v1743 = vunpack.c.l.b16 %v1707
    %v1744 = vunpack.c.l.b16 %v1708
    %v1745 = vunpack.c.l.b16 %v1709
    %v1746 = vunpack.c.l.b16 %v1710
    %v1747 = vpack.c.b16 %v1732, %v1731
    %v1748 = vpack.c.b16 %v1734, %v1733
    %v1749 = vpack.c.b16 %v1736, %v1735
    %v1750 = vpack.c.b16 %v1738, %v1737
    %v1751 = vpack.c.b16 %v1740, %v1739
    %v1752 = vpack.c.b16 %v1742, %v1741
    %v1753 = vpack.c.b16 %v1744, %v1743
    %v1754 = vpack.c.b16 %v1746, %v1745
    %1763 = vmatpush.bf16.msra.mxu0 %v1754
    %1764 = vmatpush.bf16.msra.mxu0 %v1753
    %1765 = vmatpush.bf16.msra.mxu0 %v1752
    %1766 = vmatpush.bf16.msra.mxu0 %v1751
    %1767 = vmatpush.bf16.msra.mxu0 %v1750
    %1768 = vmatpush.bf16.msra.mxu0 %v1749
    %1769 = vmatpush.bf16.msra.mxu0 %v1748
    %1770 = vmatpush.bf16.msra.mxu0 %v1747
    %1771 = vmatmul.bf16.gmra.mxu0 %v1679
    %v1772 = vpop.f32.mrf.mxu0
    %v1773 = vadd.f32 %v1713, %v1772
    %v1774 = vpop.f32.mrf.mxu0
    %v1775 = vadd.f32 %v1713, %v1774
    %1776 = vmatmul.bf16.gmra.mxu0 %v1680
    %v1777 = vpop.f32.mrf.mxu0
    %v1778 = vadd.f32 %v1713, %v1777
    %v1779 = vpop.f32.mrf.mxu0
    %v1780 = vadd.f32 %v1713, %v1779
    %1781 = vmatmul.bf16.gmra.mxu0 %v1681
    %v1782 = vpop.f32.mrf.mxu0
    %v1783 = vadd.f32 %v1713, %v1782
    %v1784 = vpop.f32.mrf.mxu0
    %v1785 = vadd.f32 %v1713, %v1784
    %1786 = vmatmul.bf16.gmra.mxu0 %v1682
    %v1787 = vpop.f32.mrf.mxu0
    %v1788 = vadd.f32 %v1713, %v1787
    %v1789 = vpop.f32.mrf.mxu0
    %v1790 = vadd.f32 %v1713, %v1789
    %1791 = vmatmul.bf16.gmra.mxu0 %v1683
    %v1792 = vpop.f32.mrf.mxu0
    %v1793 = vadd.f32 %v1713, %v1792
    %v1794 = vpop.f32.mrf.mxu0
    %v1795 = vadd.f32 %v1713, %v1794
    %1796 = vmatmul.bf16.gmra.mxu0 %v1684
    %v1797 = vpop.f32.mrf.mxu0
    %v1798 = vadd.f32 %v1713, %v1797
    %v1799 = vpop.f32.mrf.mxu0
    %v1800 = vadd.f32 %v1713, %v1799
    %1801 = vmatmul.bf16.gmra.mxu0 %v1685
    %v1802 = vpop.f32.mrf.mxu0
    %v1803 = vadd.f32 %v1713, %v1802
    %v1804 = vpop.f32.mrf.mxu0
    %v1805 = vadd.f32 %v1713, %v1804
    %1806 = vmatmul.bf16.gmra.mxu0 %v1686
    %v1807 = vpop.f32.mrf.mxu0
    %v1808 = vadd.f32 %v1713, %v1807
    %v1809 = vpop.f32.mrf.mxu0
    %v1810 = vadd.f32 %v1713, %v1809
    %1811 = vmatmul.bf16.gmra.mxu0 %v1687
    %v1812 = vpop.f32.mrf.mxu0
    %v1813 = vadd.f32 %v1713, %v1812
    %v1814 = vpop.f32.mrf.mxu0
    %v1815 = vadd.f32 %v1713, %v1814
    %1816 = vmatmul.bf16.gmra.mxu0 %v1688
    %v1817 = vpop.f32.mrf.mxu0
    %v1818 = vadd.f32 %v1713, %v1817
    %v1819 = vpop.f32.mrf.mxu0
    %v1820 = vadd.f32 %v1713, %v1819
    %1821 = vmatmul.bf16.gmra.mxu0 %v1689
    %v1822 = vpop.f32.mrf.mxu0
    %v1823 = vadd.f32 %v1713, %v1822
    %v1824 = vpop.f32.mrf.mxu0
    %v1825 = vadd.f32 %v1713, %v1824
    %1826 = vmatmul.bf16.gmra.mxu0 %v1690
    %v1827 = vpop.f32.mrf.mxu0
    %v1828 = vadd.f32 %v1713, %v1827
    %v1829 = vpop.f32.mrf.mxu0
    %v1830 = vadd.f32 %v1713, %v1829
    %1831 = vmatmul.bf16.gmra.mxu0 %v1691
    %v1832 = vpop.f32.mrf.mxu0
    %v1833 = vadd.f32 %v1713, %v1832
    %v1834 = vpop.f32.mrf.mxu0
    %v1835 = vadd.f32 %v1713, %v1834
    %1836 = vmatmul.bf16.gmra.mxu0 %v1692
    %v1837 = vpop.f32.mrf.mxu0
    %v1838 = vadd.f32 %v1713, %v1837
    %v1839 = vpop.f32.mrf.mxu0
    %v1840 = vadd.f32 %v1713, %v1839
    %1841 = vmatmul.bf16.gmra.mxu0 %v1693
    %v1842 = vpop.f32.mrf.mxu0
    %v1843 = vadd.f32 %v1713, %v1842
    %v1844 = vpop.f32.mrf.mxu0
    %v1845 = vadd.f32 %v1713, %v1844
    %1846 = vmatmul.bf16.gmra.mxu0 %v1694
    %v1847 = vpop.f32.mrf.mxu0
    %v1848 = vadd.f32 %v1713, %v1847
    %v1849 = vpop.f32.mrf.mxu0
    %v1850 = vadd.f32 %v1713, %v1849
    %1851 = vdwg.mxu0
    %v1852 = vmax.f32 %v1773, 0.0
    %v1853 = vmax.f32 %v1775, 0.0
    %v1854 = vmax.f32 %v1778, 0.0
    %v1855 = vmax.f32 %v1780, 0.0
    %v1856 = vmax.f32 %v1783, 0.0
    %v1857 = vmax.f32 %v1785, 0.0
    %v1858 = vmax.f32 %v1788, 0.0
    %v1859 = vmax.f32 %v1790, 0.0
    %v1860 = vmax.f32 %v1793, 0.0
    %v1861 = vmax.f32 %v1795, 0.0
    %v1862 = vmax.f32 %v1798, 0.0
    %v1863 = vmax.f32 %v1800, 0.0
    %v1864 = vmax.f32 %v1803, 0.0
    %v1865 = vmax.f32 %v1805, 0.0
    %v1866 = vmax.f32 %v1808, 0.0
    %v1867 = vmax.f32 %v1810, 0.0
    %v1868 = vmax.f32 %v1813, 0.0
    %v1869 = vmax.f32 %v1815, 0.0
    %v1870 = vmax.f32 %v1818, 0.0
    %v1871 = vmax.f32 %v1820, 0.0
    %v1872 = vmax.f32 %v1823, 0.0
    %v1873 = vmax.f32 %v1825, 0.0
    %v1874 = vmax.f32 %v1828, 0.0
    %v1875 = vmax.f32 %v1830, 0.0
    %v1876 = vmax.f32 %v1833, 0.0
    %v1877 = vmax.f32 %v1835, 0.0
    %v1878 = vmax.f32 %v1838, 0.0
    %v1879 = vmax.f32 %v1840, 0.0
    %v1880 = vmax.f32 %v1843, 0.0
    %v1881 = vmax.f32 %v1845, 0.0
    %v1882 = vmax.f32 %v1848, 0.0
    %v1883 = vmax.f32 %v1850, 0.0
    %v1884 = vpack.c.bf16 %v1853, %v1852
    %v1885 = vpack.c.bf16 %v1855, %v1854
    %v1886 = vpack.c.bf16 %v1857, %v1856
    %v1887 = vpack.c.bf16 %v1859, %v1858
    %v1888 = vpack.c.bf16 %v1861, %v1860
    %v1889 = vpack.c.bf16 %v1863, %v1862
    %v1890 = vpack.c.bf16 %v1865, %v1864
    %v1891 = vpack.c.bf16 %v1867, %v1866
    %v1892 = vpack.c.bf16 %v1869, %v1868
    %v1893 = vpack.c.bf16 %v1871, %v1870
    %v1894 = vpack.c.bf16 %v1873, %v1872
    %v1895 = vpack.c.bf16 %v1875, %v1874
    %v1896 = vpack.c.bf16 %v1877, %v1876
    %v1897 = vpack.c.bf16 %v1879, %v1878
    %v1898 = vpack.c.bf16 %v1881, %v1880
    %v1899 = vpack.c.bf16 %v1883, %v1882
    %v1900 = vld [vmem:[#allocation14] sm:$0xf]
    %v1901 = vld [vmem:[#allocation14 + $0x4] sm:$0xf]
    %v1902 = vld [vmem:[#allocation14 + $0x8] sm:$0xf]
    %v1903 = vld [vmem:[#allocation14 + $0xc] sm:$0xf]
    %v1904 = vld [vmem:[#allocation14 + $0x10] sm:$0xf]
    %v1905 = vld [vmem:[#allocation14 + $0x14] sm:$0xf]
    %v1906 = vld [vmem:[#allocation14 + $0x18] sm:$0xf]
    %v1907 = vld [vmem:[#allocation14 + $0x1c] sm:$0xf]
    %v1908 = vld [vmem:[#allocation14 + $0x20] sm:$0xf]
    %v1909 = vld [vmem:[#allocation14 + $0x24] sm:$0xf]
    %v1910 = vld [vmem:[#allocation14 + $0x28] sm:$0xf]
    %v1911 = vld [vmem:[#allocation14 + $0x2c] sm:$0xf]
    %v1912 = vld [vmem:[#allocation14 + $0x30] sm:$0xf]
    %v1913 = vld [vmem:[#allocation14 + $0x34] sm:$0xf]
    %v1914 = vld [vmem:[#allocation14 + $0x38] sm:$0xf]
    %v1915 = vld [vmem:[#allocation14 + $0x3c] sm:$0xf]
    %v1916 = vld [vmem:[#allocation16] sm:$0x1]
    %v1918 = vperm.slane %v1916, 0
    %v1936 = vunpack.c.l.b16 %v1900
    %v1937 = vunpack.c.l.b16 %v1901
    %v1938 = vunpack.c.l.b16 %v1902
    %v1939 = vunpack.c.l.b16 %v1903
    %v1940 = vunpack.c.l.b16 %v1904
    %v1941 = vunpack.c.l.b16 %v1905
    %v1942 = vunpack.c.l.b16 %v1906
    %v1943 = vunpack.c.l.b16 %v1907
    %v1944 = vunpack.c.l.b16 %v1908
    %v1945 = vunpack.c.l.b16 %v1909
    %v1946 = vunpack.c.l.b16 %v1910
    %v1947 = vunpack.c.l.b16 %v1911
    %v1948 = vunpack.c.l.b16 %v1912
    %v1949 = vunpack.c.l.b16 %v1913
    %v1950 = vunpack.c.l.b16 %v1914
    %v1951 = vunpack.c.l.b16 %v1915
    %v1952 = vpack.c.b16 %v1937, %v1936
    %v1953 = vpack.c.b16 %v1939, %v1938
    %v1954 = vpack.c.b16 %v1941, %v1940
    %v1955 = vpack.c.b16 %v1943, %v1942
    %v1956 = vpack.c.b16 %v1945, %v1944
    %v1957 = vpack.c.b16 %v1947, %v1946
    %v1958 = vpack.c.b16 %v1949, %v1948
    %v1959 = vpack.c.b16 %v1951, %v1950
    %1968 = vmatpush.bf16.msra.mxu0 %v1959
    %1969 = vmatpush.bf16.msra.mxu0 %v1958
    %1970 = vmatpush.bf16.msra.mxu0 %v1957
    %1971 = vmatpush.bf16.msra.mxu0 %v1956
    %1972 = vmatpush.bf16.msra.mxu0 %v1955
    %1973 = vmatpush.bf16.msra.mxu0 %v1954
    %1974 = vmatpush.bf16.msra.mxu0 %v1953
    %1975 = vmatpush.bf16.msra.mxu0 %v1952
    %1976 = vmatmul.bf16.gmra.mxu0 %v1884
    %v1977 = vpop.f32.mrf.mxu0
    %v1978 = vadd.f32 %v1918, %v1977
    %v1979 = vpop.f32.mrf.mxu0
    %v1980 = vadd.f32 %v1918, %v1979
    %1981 = vmatmul.bf16.gmra.mxu0 %v1885
    %v1982 = vpop.f32.mrf.mxu0
    %v1983 = vadd.f32 %v1918, %v1982
    %v1984 = vpop.f32.mrf.mxu0
    %v1985 = vadd.f32 %v1918, %v1984
    %1986 = vmatmul.bf16.gmra.mxu0 %v1886
    %v1987 = vpop.f32.mrf.mxu0
    %v1988 = vadd.f32 %v1918, %v1987
    %v1989 = vpop.f32.mrf.mxu0
    %v1990 = vadd.f32 %v1918, %v1989
    %1991 = vmatmul.bf16.gmra.mxu0 %v1887
    %v1992 = vpop.f32.mrf.mxu0
    %v1993 = vadd.f32 %v1918, %v1992
    %v1994 = vpop.f32.mrf.mxu0
    %v1995 = vadd.f32 %v1918, %v1994
    %1996 = vmatmul.bf16.gmra.mxu0 %v1888
    %v1997 = vpop.f32.mrf.mxu0
    %v1998 = vadd.f32 %v1918, %v1997
    %v1999 = vpop.f32.mrf.mxu0
    %v2000 = vadd.f32 %v1918, %v1999
    %2001 = vmatmul.bf16.gmra.mxu0 %v1889
    %v2002 = vpop.f32.mrf.mxu0
    %v2003 = vadd.f32 %v1918, %v2002
    %v2004 = vpop.f32.mrf.mxu0
    %v2005 = vadd.f32 %v1918, %v2004
    %2006 = vmatmul.bf16.gmra.mxu0 %v1890
    %v2007 = vpop.f32.mrf.mxu0
    %v2008 = vadd.f32 %v1918, %v2007
    %v2009 = vpop.f32.mrf.mxu0
    %v2010 = vadd.f32 %v1918, %v2009
    %2011 = vmatmul.bf16.gmra.mxu0 %v1891
    %v2012 = vpop.f32.mrf.mxu0
    %v2013 = vadd.f32 %v1918, %v2012
    %v2014 = vpop.f32.mrf.mxu0
    %v2015 = vadd.f32 %v1918, %v2014
    %2016 = vmatmul.bf16.gmra.mxu0 %v1892
    %v2017 = vpop.f32.mrf.mxu0
    %v2018 = vadd.f32 %v1918, %v2017
    %v2019 = vpop.f32.mrf.mxu0
    %v2020 = vadd.f32 %v1918, %v2019
    %2021 = vmatmul.bf16.gmra.mxu0 %v1893
    %v2022 = vpop.f32.mrf.mxu0
    %v2023 = vadd.f32 %v1918, %v2022
    %v2024 = vpop.f32.mrf.mxu0
    %v2025 = vadd.f32 %v1918, %v2024
    %2026 = vmatmul.bf16.gmra.mxu0 %v1894
    %v2027 = vpop.f32.mrf.mxu0
    %v2028 = vadd.f32 %v1918, %v2027
    %v2029 = vpop.f32.mrf.mxu0
    %v2030 = vadd.f32 %v1918, %v2029
    %2031 = vmatmul.bf16.gmra.mxu0 %v1895
    %v2032 = vpop.f32.mrf.mxu0
    %v2033 = vadd.f32 %v1918, %v2032
    %v2034 = vpop.f32.mrf.mxu0
    %v2035 = vadd.f32 %v1918, %v2034
    %2036 = vmatmul.bf16.gmra.mxu0 %v1896
    %v2037 = vpop.f32.mrf.mxu0
    %v2038 = vadd.f32 %v1918, %v2037
    %v2039 = vpop.f32.mrf.mxu0
    %v2040 = vadd.f32 %v1918, %v2039
    %2041 = vmatmul.bf16.gmra.mxu0 %v1897
    %v2042 = vpop.f32.mrf.mxu0
    %v2043 = vadd.f32 %v1918, %v2042
    %v2044 = vpop.f32.mrf.mxu0
    %v2045 = vadd.f32 %v1918, %v2044
    %2046 = vmatmul.bf16.gmra.mxu0 %v1898
    %v2047 = vpop.f32.mrf.mxu0
    %v2048 = vadd.f32 %v1918, %v2047
    %v2049 = vpop.f32.mrf.mxu0
    %v2050 = vadd.f32 %v1918, %v2049
    %2051 = vmatmul.bf16.gmra.mxu0 %v1899
    %v2052 = vpop.f32.mrf.mxu0
    %v2053 = vadd.f32 %v1918, %v2052
    %v2054 = vpop.f32.mrf.mxu0
    %v2055 = vadd.f32 %v1918, %v2054
    %2056 = vdwg.mxu0
    %2057 = vst [vmem:[#allocation17] sm:$0xff] %v1978
    %2058 = vst [vmem:[#allocation17 + $0x8] sm:$0xff] %v1980
    %2059 = vst [vmem:[#allocation17 + $0x10] sm:$0xff] %v1983
    %2060 = vst [vmem:[#allocation17 + $0x18] sm:$0xff] %v1985
    %2061 = vst [vmem:[#allocation17 + $0x20] sm:$0xff] %v1988
    %2062 = vst [vmem:[#allocation17 + $0x28] sm:$0xff] %v1990
    %2063 = vst [vmem:[#allocation17 + $0x30] sm:$0xff] %v1993
    %2064 = vst [vmem:[#allocation17 + $0x38] sm:$0xff] %v1995
    %2065 = vst [vmem:[#allocation17 + $0x40] sm:$0xff] %v1998
    %2066 = vst [vmem:[#allocation17 + $0x48] sm:$0xff] %v2000
    %2067 = vst [vmem:[#allocation17 + $0x50] sm:$0xff] %v2003
    %2068 = vst [vmem:[#allocation17 + $0x58] sm:$0xff] %v2005
    %2069 = vst [vmem:[#allocation17 + $0x60] sm:$0xff] %v2008
    %2070 = vst [vmem:[#allocation17 + $0x68] sm:$0xff] %v2010
    %2071 = vst [vmem:[#allocation17 + $0x70] sm:$0xff] %v2013
    %2072 = vst [vmem:[#allocation17 + $0x78] sm:$0xff] %v2015
    %2073 = vst [vmem:[#allocation17 + $0x80] sm:$0xff] %v2018
    %2074 = vst [vmem:[#allocation17 + $0x88] sm:$0xff] %v2020
    %2075 = vst [vmem:[#allocation17 + $0x90] sm:$0xff] %v2023
    %2076 = vst [vmem:[#allocation17 + $0x98] sm:$0xff] %v2025
    %2077 = vst [vmem:[#allocation17 + $0xa0] sm:$0xff] %v2028
    %2078 = vst [vmem:[#allocation17 + $0xa8] sm:$0xff] %v2030
    %2079 = vst [vmem:[#allocation17 + $0xb0] sm:$0xff] %v2033
    %2080 = vst [vmem:[#allocation17 + $0xb8] sm:$0xff] %v2035
    %2081 = vst [vmem:[#allocation17 + $0xc0] sm:$0xff] %v2038
    %2082 = vst [vmem:[#allocation17 + $0xc8] sm:$0xff] %v2040
    %2083 = vst [vmem:[#allocation17 + $0xd0] sm:$0xff] %v2043
    %2084 = vst [vmem:[#allocation17 + $0xd8] sm:$0xff] %v2045
    %2085 = vst [vmem:[#allocation17 + $0xe0] sm:$0xff] %v2048
    %2086 = vst [vmem:[#allocation17 + $0xe8] sm:$0xff] %v2050
    %2087 = vst [vmem:[#allocation17 + $0xf0] sm:$0xff] %v2053
    %2088 = vst [vmem:[#allocation17 + $0xf8] sm:$0xff] %v2055
    // Predicated region
    $region86: #{neural_gnn_forward_padded.1} parent=1 // pred_check
      _
    $region87: #{neural_gnn_forward_padded.1} parent=1 // pred_check_branch
      %2090 = sbr.rel (0) target = $region89
    $region88: #{neural_gnn_forward_padded.1} parent=1 // pred_region
      %2092 = vsyncadd [#allocation4], 0
      %s2093 = sshll.u32 [#allocation17], 4
      %s2094 = int_to_ptr.vmem [resolvable:$true] %s2093
      %s2095 = sshll.u32 %s12, 4
      %s2096 = int_to_ptr.hbm [resolvable:$true] %s2095
      %2101 = dma.vmem_to_hbm [thread:$0]  %s2094, 4096, %s2096, [#allocation4], 128, 128, 8
    $region89: #{neural_gnn_forward_padded.1} parent=1 // pred_fallthru
      _
    // Predicated region
    $region90: #{neural_gnn_forward_padded.1} parent=1 // pred_check
      _
    $region91: #{neural_gnn_forward_padded.1} parent=1 // pred_check_branch
      %2103 = sbr.rel (0) target = $region93
    $region92: #{neural_gnn_forward_padded.1} parent=1 // pred_region
      %2105 = dma.done [#allocation4], 4096
    $region93: #{neural_gnn_forward_padded.1} parent=1 // pred_fallthru
      _
    %2106 = vsyncpa [#allocation3], 1
    %2107 = vsyncpa [#allocation6], 1
    %2108 = vsyncpa [#allocation9], 1
    %2109 = vsyncpa [#allocation12], 1
    %2110 = vsyncpa [#allocation15], 1
    %2111 = vsyncpa [#allocation4], 1

</llo_original>
